<compile_context>
chip_gen: v7x
topology: tpu7x:2x2x1
jax: 0.10.0
libtpu: 0.0.40
codegen_flags: <defaults>
</compile_context>

<pallas_src>
import jax
import jax.numpy as jnp
from jax import lax
from jax.experimental import pallas as pl
from jax.experimental.pallas import tpu as pltpu

D_MODEL = 32           # cfg.model_parameters.d_model
N_HEADS = 4            # cfg.model_parameters.num_heads
HEAD_DIM = D_MODEL // N_HEADS
L = 5                  # shots; AvgPool2d((5,1)) pools exactly this axis
EPS = 1e-6             # F.pairwise_distance default eps
NEG_INF = -1e30        # additive mask value (finite to keep exp() exactly 0, no NaNs)
B = 2                  # batch (episode) size
BLOCK_B = 8            # episodes per grid step (multiple of 8 to fill sublanes)


def cross_attn_distance_kernel(x_ref, w_ref, b_ref, abias_ref, dpool_ref, out_ref):
    # x_ref:     [R, D]   R = 2*L*TB rows, episode-major: [support shots | query shots]
    # w_ref:     [D, 4D]  [Wq*scale | Wk | Wv | Wo]
    # b_ref:     [1, 4D]  [bq*scale | bk | bv | bo]
    # abias_ref: [R, R]   0 where (same episode, opposite direction), -1e30 elsewhere
    # dpool_ref: [TB, R]  +1/L on support rows, -1/L on query rows of each episode
    # out_ref:   [TB, 1]  -pairwise_distance per episode
    x = x_ref[...]                       # features consumed in native dtype (no upcast)
    w = w_ref[...]
    b = b_ref[...]

    # Single fused projection: one 128-lane-wide MXU push for Q|K|V (the last D columns,
    # x @ Wo, are unused here -- Wo is applied to the attention output below -- but the
    # single lane-dense slab keeps it to one weight ref, one bias ref, one matmul).
    proj = jnp.dot(x, w, preferred_element_type=jnp.float32) + b         # [R, 4D]
    q = proj[:, 0 * D_MODEL:1 * D_MODEL]        # already scaled by 1/sqrt(HEAD_DIM)
    k = proj[:, 1 * D_MODEL:2 * D_MODEL]
    v = proj[:, 2 * D_MODEL:3 * D_MODEL]

    abias = abias_ref[...]                                                # [R, R]

    # Per-head attention: every op spans ALL episodes of the tile and BOTH cross-
    # attention directions at once; the additive mask enforces block-diagonal
    # (per-episode), cross-direction attention.  4-way static unroll of 2D ops.
    head_outs = []
    for h in range(N_HEADS):
        sl = slice(h * HEAD_DIM, (h + 1) * HEAD_DIM)
        s = lax.dot_general(q[:, sl], k[:, sl], (((1,), (1,)), ((), ())),
                            preferred_element_type=jnp.float32)           # [R, R]
        s = s + abias
        s = s - jnp.max(s, axis=-1, keepdims=True)
        p = jnp.exp(s)
        p = p * pl.reciprocal(jnp.sum(p, axis=-1, keepdims=True), approx=True)
        head_outs.append(jnp.dot(p, v[:, sl], preferred_element_type=jnp.float32))
    attn = jnp.concatenate(head_outs, axis=-1)                            # [R, D]

    # Output projection (Wo columns of the slab).
    o = (jnp.dot(attn, w[:, 3 * D_MODEL:], preferred_element_type=jnp.float32)
         + b[:, 3 * D_MODEL:])                                            # [R, D]

    # AvgPool2d((L,1)) + (support_pool - query_pool) fused into one matmul with the
    # precomputed +-1/L matrix; eps added to the difference (F.pairwise_distance).
    diff = jnp.dot(dpool_ref[...], o, preferred_element_type=jnp.float32) + EPS  # [TB, D]
    out_ref[...] = -jnp.sqrt(jnp.sum(diff * diff, axis=-1, keepdims=True))       # [TB, 1]


def cross_attention_distance(s_feat, q_feat, params, block_b=BLOCK_B):
    """score = -pairwise_distance(avgpool(cross_attn(s, q)), avgpool(cross_attn(q, s)))."""
    wq, wk, wv, wo, bq, bk, bv, bo = params
    bsz = s_feat.shape[0]
    assert block_b % 8 == 0, "episode tile must be a multiple of 8 (sublane tiling)"
    tb = block_b
    nb = pl.cdiv(bsz, tb)                 # >1 batch tiles also megacore-shard on v7x
    b_pad = nb * tb
    if b_pad != bsz:                      # pad episodes (zeros are harmless, sliced off)
        pad = ((0, b_pad - bsz), (0, 0), (0, 0))
        s_feat = jnp.pad(s_feat, pad)
        q_feat = jnp.pad(q_feat, pad)

    # Rows: episode-major, [support shots (L) | query shots (L)] per episode.
    feats = jnp.stack([s_feat, q_feat], axis=1).reshape(b_pad * 2 * L, D_MODEL)

    # Fold softmax scale into Wq/bq; fuse all weights & biases into lane-dense slabs.
    scale = 1.0 / (HEAD_DIM ** 0.5)
    w_slab = jnp.concatenate([wq * scale, wk, wv, wo], axis=1)            # [D, 4D]
    b_slab = jnp.concatenate([bq * scale, bk, bv, bo], axis=1)            # [1, 4D]

    # Per-tile constants (same for every grid step): attention mask and pool/diff matrix.
    r_tile = 2 * L * tb
    r = jnp.arange(r_tile)
    epi = r // (2 * L)                    # episode index within the tile
    is_q = (r // L) % 2                   # 0 = support row, 1 = query row
    valid = (epi[:, None] == epi[None, :]) & (is_q[:, None] != is_q[None, :])
    abias = jnp.where(valid, 0.0, NEG_INF).astype(jnp.float32)            # [R, R]
    sign = jnp.where(is_q == 0, 1.0, -1.0) / L
    dpool = ((jnp.arange(tb)[:, None] == epi[None, :]).astype(jnp.float32)
             * sign[None, :])                                             # [TB, R]

    out = pl.pallas_call(
        cross_attn_distance_kernel,
        out_shape=jax.ShapeDtypeStruct((b_pad, 1), jnp.float32),
        grid=(nb,),
        in_specs=[
            pl.BlockSpec((r_tile, D_MODEL), lambda i: (i, 0)),
            pl.BlockSpec((D_MODEL, 4 * D_MODEL), lambda i: (0, 0)),
            pl.BlockSpec((1, 4 * D_MODEL), lambda i: (0, 0)),
            pl.BlockSpec((r_tile, r_tile), lambda i: (0, 0)),
            pl.BlockSpec((tb, r_tile), lambda i: (0, 0)),
        ],
        out_specs=pl.BlockSpec((tb, 1), lambda i: (i, 0)),
        compiler_params=pltpu.CompilerParams(
            dimension_semantics=("parallel",)),
    )(feats, w_slab, b_slab, abias, dpool)
    return out[:bsz]


def reference(s_feat, q_feat, params):
    """Pure-JAX reference of the same math (sanity check)."""
    wq, wk, wv, wo, bq, bk, bv, bo = params
    scale = 1.0 / (HEAD_DIM ** 0.5)

    def mha(x_q, x_kv):
        q = (x_q @ wq + bq) * scale
        k = x_kv @ wk + bk
        v = x_kv @ wv + bv
        qh = q.reshape(L, N_HEADS, HEAD_DIM).transpose(1, 0, 2)
        kh = k.reshape(L, N_HEADS, HEAD_DIM).transpose(1, 0, 2)
        vh = v.reshape(L, N_HEADS, HEAD_DIM).transpose(1, 0, 2)
        s = jnp.einsum('hqd,hkd->hqk', qh, kh)
        p = jax.nn.softmax(s, axis=-1)
        o = jnp.einsum('hqk,hkd->hqd', p, vh).transpose(1, 0, 2).reshape(L, D_MODEL)
        return o @ wo + bo

    def one(s, q):
        sp = jnp.mean(mha(s, q), axis=0)
        qp = jnp.mean(mha(q, s), axis=0)
        d = sp - qp + EPS
        return -jnp.sqrt(jnp.sum(d * d))

    return jax.vmap(one)(s_feat, q_feat)[:, None]


if __name__ == "__main__":
    key = jax.random.PRNGKey(0)
    ks = jax.random.split(key, 10)
    w_init = 1.0 / jnp.sqrt(jnp.float32(D_MODEL))

    wq = jax.random.normal(ks[0], (D_MODEL, D_MODEL), jnp.float32) * w_init
    wk = jax.random.normal(ks[1], (D_MODEL, D_MODEL), jnp.float32) * w_init
    wv = jax.random.normal(ks[2], (D_MODEL, D_MODEL), jnp.float32) * w_init
    wo = jax.random.normal(ks[3], (D_MODEL, D_MODEL), jnp.float32) * w_init
    bq = jax.random.normal(ks[4], (1, D_MODEL), jnp.float32) * 0.01
    bk = jax.random.normal(ks[5], (1, D_MODEL), jnp.float32) * 0.01
    bv = jax.random.normal(ks[6], (1, D_MODEL), jnp.float32) * 0.01
    bo = jax.random.normal(ks[7], (1, D_MODEL), jnp.float32) * 0.01
    params = (wq, wk, wv, wo, bq, bk, bv, bo)

    # "Extracted" support/query features (the pretrained extractor is stubbed).
    s_feat = jax.random.normal(ks[8], (B, L, D_MODEL), jnp.float32)
    q_feat = jax.random.normal(ks[9], (B, L, D_MODEL), jnp.float32)

    score = jax.block_until_ready(cross_attention_distance(s_feat, q_feat, params))
    ref = jax.block_until_ready(reference(s_feat, q_feat, params))

    assert score.shape == (B, 1)
    # Tolerance accounts for the EUP approximate reciprocal in the softmax denominator.
    assert jnp.allclose(score, ref, rtol=1e-2, atol=1e-2), (score, ref)

    print("KERNEL_OK")
</pallas_src>

<mosaic_0001>
module attributes {stable_mosaic.version = 11 : i64} {
  func.func @cross_attn_distance_kernel(%arg0: i32, %arg1: memref<80x32xf32, #tpu.memory_space<vmem>>, %arg2: memref<32x128xf32, #tpu.memory_space<vmem>>, %arg3: memref<1x128xf32, #tpu.memory_space<vmem>>, %arg4: memref<80x80xf32, #tpu.memory_space<vmem>>, %arg5: memref<8x80xf32, #tpu.memory_space<vmem>>, %arg6: memref<8x1xf32, #tpu.memory_space<vmem>>) attributes {dimension_semantics = [#tpu.dimension_semantics<parallel>], iteration_bounds = array<i64: 1>, scalar_prefetch = 0 : i64, scratch_operands = 0 : i64, tpu.core_type = #tpu.core_type<tc>, window_params = [{transform_indices = @transform_0, window_bounds = array<i64: 80, 32>}, {pipeline_mode = #tpu.pipeline_mode<synchronous>, transform_indices = @transform_1, window_bounds = array<i64: 32, 128>}, {pipeline_mode = #tpu.pipeline_mode<synchronous>, transform_indices = @transform_2, window_bounds = array<i64: 1, 128>}, {pipeline_mode = #tpu.pipeline_mode<synchronous>, transform_indices = @transform_3, window_bounds = array<i64: 80, 80>}, {pipeline_mode = #tpu.pipeline_mode<synchronous>, transform_indices = @transform_4, window_bounds = array<i64: 8, 80>}, {transform_indices = @transform_5, window_bounds = array<i64: 8, 1>}]} {
    %c0 = arith.constant 0 : index
    %c0_0 = arith.constant 0 : index
    %0 = vector.load %arg1[%c0, %c0_0] : memref<80x32xf32, #tpu.memory_space<vmem>>, vector<80x32xf32>
    %c0_1 = arith.constant 0 : index
    %c0_2 = arith.constant 0 : index
    %1 = vector.load %arg2[%c0_1, %c0_2] : memref<32x128xf32, #tpu.memory_space<vmem>>, vector<32x128xf32>
    %c0_3 = arith.constant 0 : index
    %c0_4 = arith.constant 0 : index
    %2 = vector.load %arg3[%c0_3, %c0_4] : memref<1x128xf32, #tpu.memory_space<vmem>>, vector<1x128xf32>
    %cst = arith.constant dense<0.000000e+00> : vector<80x128xf32>
    %3 = tpu.matmul %0, %1, %cst {dimension_numbers = #tpu.dot_dimension_numbers<[1], [0], [0], [1], [0, 0, 1, 1], [], []>} : vector<80x32xf32>, vector<32x128xf32>, vector<80x128xf32> -> vector<80x128xf32>
    %4 = vector.broadcast %2 : vector<1x128xf32> to vector<80x128xf32>
    %5 = arith.addf %3, %4 : vector<80x128xf32>
    %6 = vector.extract_strided_slice %5 {offsets = [0, 0], sizes = [80, 32], strides = [1, 1]} : vector<80x128xf32> to vector<80x32xf32>
    %7 = vector.extract_strided_slice %5 {offsets = [0, 32], sizes = [80, 32], strides = [1, 1]} : vector<80x128xf32> to vector<80x32xf32>
    %8 = vector.extract_strided_slice %5 {offsets = [0, 64], sizes = [80, 32], strides = [1, 1]} : vector<80x128xf32> to vector<80x32xf32>
    %c0_5 = arith.constant 0 : index
    %c0_6 = arith.constant 0 : index
    %9 = vector.load %arg4[%c0_5, %c0_6] : memref<80x80xf32, #tpu.memory_space<vmem>>, vector<80x80xf32>
    %10 = vector.extract_strided_slice %6 {offsets = [0, 0], sizes = [80, 8], strides = [1, 1]} : vector<80x32xf32> to vector<80x8xf32>
    %11 = vector.extract_strided_slice %7 {offsets = [0, 0], sizes = [80, 8], strides = [1, 1]} : vector<80x32xf32> to vector<80x8xf32>
    %cst_7 = arith.constant dense<0.000000e+00> : vector<80x80xf32>
    %12 = tpu.matmul %10, %11, %cst_7 {dimension_numbers = #tpu.dot_dimension_numbers<[1], [1], [0], [0], [0, 0, 1, 0], [], []>} : vector<80x8xf32>, vector<80x8xf32>, vector<80x80xf32> -> vector<80x80xf32>
    %13 = arith.addf %12, %9 : vector<80x80xf32>
    %cst_8 = arith.constant dense<0xFF800000> : vector<80xf32>
    %14 = vector.multi_reduction <maximumf>, %13, %cst_8 [1] : vector<80x80xf32> to vector<80xf32>
    %15 = vector.shape_cast %14 : vector<80xf32> to vector<80x1xf32>
    %16 = vector.broadcast %15 : vector<80x1xf32> to vector<80x80xf32>
    %17 = arith.subf %13, %16 : vector<80x80xf32>
    %18 = math.exp %17 : vector<80x80xf32>
    %cst_9 = arith.constant dense<0.000000e+00> : vector<80xf32>
    %19 = vector.multi_reduction <add>, %18, %cst_9 [1] : vector<80x80xf32> to vector<80xf32>
    %20 = vector.shape_cast %19 : vector<80xf32> to vector<80x1xf32>
    %21 = tpu.reciprocal %20 {approx = true} : vector<80x1xf32> -> vector<80x1xf32>
    %22 = vector.broadcast %21 : vector<80x1xf32> to vector<80x80xf32>
    %23 = arith.mulf %18, %22 : vector<80x80xf32>
    %24 = vector.extract_strided_slice %8 {offsets = [0, 0], sizes = [80, 8], strides = [1, 1]} : vector<80x32xf32> to vector<80x8xf32>
    %cst_10 = arith.constant dense<0.000000e+00> : vector<80x8xf32>
    %25 = tpu.matmul %23, %24, %cst_10 {dimension_numbers = #tpu.dot_dimension_numbers<[1], [0], [0], [1], [0, 0, 1, 1], [], []>} : vector<80x80xf32>, vector<80x8xf32>, vector<80x8xf32> -> vector<80x8xf32>
    %26 = vector.extract_strided_slice %6 {offsets = [0, 8], sizes = [80, 8], strides = [1, 1]} : vector<80x32xf32> to vector<80x8xf32>
    %27 = vector.extract_strided_slice %7 {offsets = [0, 8], sizes = [80, 8], strides = [1, 1]} : vector<80x32xf32> to vector<80x8xf32>
    %cst_11 = arith.constant dense<0.000000e+00> : vector<80x80xf32>
    %28 = tpu.matmul %26, %27, %cst_11 {dimension_numbers = #tpu.dot_dimension_numbers<[1], [1], [0], [0], [0, 0, 1, 0], [], []>} : vector<80x8xf32>, vector<80x8xf32>, vector<80x80xf32> -> vector<80x80xf32>
    %29 = arith.addf %28, %9 : vector<80x80xf32>
    %cst_12 = arith.constant dense<0xFF800000> : vector<80xf32>
    %30 = vector.multi_reduction <maximumf>, %29, %cst_12 [1] : vector<80x80xf32> to vector<80xf32>
    %31 = vector.shape_cast %30 : vector<80xf32> to vector<80x1xf32>
    %32 = vector.broadcast %31 : vector<80x1xf32> to vector<80x80xf32>
    %33 = arith.subf %29, %32 : vector<80x80xf32>
    %34 = math.exp %33 : vector<80x80xf32>
    %cst_13 = arith.constant dense<0.000000e+00> : vector<80xf32>
    %35 = vector.multi_reduction <add>, %34, %cst_13 [1] : vector<80x80xf32> to vector<80xf32>
    %36 = vector.shape_cast %35 : vector<80xf32> to vector<80x1xf32>
    %37 = tpu.reciprocal %36 {approx = true} : vector<80x1xf32> -> vector<80x1xf32>
    %38 = vector.broadcast %37 : vector<80x1xf32> to vector<80x80xf32>
    %39 = arith.mulf %34, %38 : vector<80x80xf32>
    %40 = vector.extract_strided_slice %8 {offsets = [0, 8], sizes = [80, 8], strides = [1, 1]} : vector<80x32xf32> to vector<80x8xf32>
    %cst_14 = arith.constant dense<0.000000e+00> : vector<80x8xf32>
    %41 = tpu.matmul %39, %40, %cst_14 {dimension_numbers = #tpu.dot_dimension_numbers<[1], [0], [0], [1], [0, 0, 1, 1], [], []>} : vector<80x80xf32>, vector<80x8xf32>, vector<80x8xf32> -> vector<80x8xf32>
    %42 = vector.extract_strided_slice %6 {offsets = [0, 16], sizes = [80, 8], strides = [1, 1]} : vector<80x32xf32> to vector<80x8xf32>
    %43 = vector.extract_strided_slice %7 {offsets = [0, 16], sizes = [80, 8], strides = [1, 1]} : vector<80x32xf32> to vector<80x8xf32>
    %cst_15 = arith.constant dense<0.000000e+00> : vector<80x80xf32>
    %44 = tpu.matmul %42, %43, %cst_15 {dimension_numbers = #tpu.dot_dimension_numbers<[1], [1], [0], [0], [0, 0, 1, 0], [], []>} : vector<80x8xf32>, vector<80x8xf32>, vector<80x80xf32> -> vector<80x80xf32>
    %45 = arith.addf %44, %9 : vector<80x80xf32>
    %cst_16 = arith.constant dense<0xFF800000> : vector<80xf32>
    %46 = vector.multi_reduction <maximumf>, %45, %cst_16 [1] : vector<80x80xf32> to vector<80xf32>
    %47 = vector.shape_cast %46 : vector<80xf32> to vector<80x1xf32>
    %48 = vector.broadcast %47 : vector<80x1xf32> to vector<80x80xf32>
    %49 = arith.subf %45, %48 : vector<80x80xf32>
    %50 = math.exp %49 : vector<80x80xf32>
    %cst_17 = arith.constant dense<0.000000e+00> : vector<80xf32>
    %51 = vector.multi_reduction <add>, %50, %cst_17 [1] : vector<80x80xf32> to vector<80xf32>
    %52 = vector.shape_cast %51 : vector<80xf32> to vector<80x1xf32>
    %53 = tpu.reciprocal %52 {approx = true} : vector<80x1xf32> -> vector<80x1xf32>
    %54 = vector.broadcast %53 : vector<80x1xf32> to vector<80x80xf32>
    %55 = arith.mulf %50, %54 : vector<80x80xf32>
    %56 = vector.extract_strided_slice %8 {offsets = [0, 16], sizes = [80, 8], strides = [1, 1]} : vector<80x32xf32> to vector<80x8xf32>
    %cst_18 = arith.constant dense<0.000000e+00> : vector<80x8xf32>
    %57 = tpu.matmul %55, %56, %cst_18 {dimension_numbers = #tpu.dot_dimension_numbers<[1], [0], [0], [1], [0, 0, 1, 1], [], []>} : vector<80x80xf32>, vector<80x8xf32>, vector<80x8xf32> -> vector<80x8xf32>
    %58 = vector.extract_strided_slice %6 {offsets = [0, 24], sizes = [80, 8], strides = [1, 1]} : vector<80x32xf32> to vector<80x8xf32>
    %59 = vector.extract_strided_slice %7 {offsets = [0, 24], sizes = [80, 8], strides = [1, 1]} : vector<80x32xf32> to vector<80x8xf32>
    %cst_19 = arith.constant dense<0.000000e+00> : vector<80x80xf32>
    %60 = tpu.matmul %58, %59, %cst_19 {dimension_numbers = #tpu.dot_dimension_numbers<[1], [1], [0], [0], [0, 0, 1, 0], [], []>} : vector<80x8xf32>, vector<80x8xf32>, vector<80x80xf32> -> vector<80x80xf32>
    %61 = arith.addf %60, %9 : vector<80x80xf32>
    %cst_20 = arith.constant dense<0xFF800000> : vector<80xf32>
    %62 = vector.multi_reduction <maximumf>, %61, %cst_20 [1] : vector<80x80xf32> to vector<80xf32>
    %63 = vector.shape_cast %62 : vector<80xf32> to vector<80x1xf32>
    %64 = vector.broadcast %63 : vector<80x1xf32> to vector<80x80xf32>
    %65 = arith.subf %61, %64 : vector<80x80xf32>
    %66 = math.exp %65 : vector<80x80xf32>
    %cst_21 = arith.constant dense<0.000000e+00> : vector<80xf32>
    %67 = vector.multi_reduction <add>, %66, %cst_21 [1] : vector<80x80xf32> to vector<80xf32>
    %68 = vector.shape_cast %67 : vector<80xf32> to vector<80x1xf32>
    %69 = tpu.reciprocal %68 {approx = true} : vector<80x1xf32> -> vector<80x1xf32>
    %70 = vector.broadcast %69 : vector<80x1xf32> to vector<80x80xf32>
    %71 = arith.mulf %66, %70 : vector<80x80xf32>
    %72 = vector.extract_strided_slice %8 {offsets = [0, 24], sizes = [80, 8], strides = [1, 1]} : vector<80x32xf32> to vector<80x8xf32>
    %cst_22 = arith.constant dense<0.000000e+00> : vector<80x8xf32>
    %73 = tpu.matmul %71, %72, %cst_22 {dimension_numbers = #tpu.dot_dimension_numbers<[1], [0], [0], [1], [0, 0, 1, 1], [], []>} : vector<80x80xf32>, vector<80x8xf32>, vector<80x8xf32> -> vector<80x8xf32>
    %74 = tpu.concatenate %25, %41, %57, %73 in 1 : vector<80x8xf32>, vector<80x8xf32>, vector<80x8xf32>, vector<80x8xf32> -> vector<80x32xf32>
    %75 = vector.extract_strided_slice %1 {offsets = [0, 96], sizes = [32, 32], strides = [1, 1]} : vector<32x128xf32> to vector<32x32xf32>
    %cst_23 = arith.constant dense<0.000000e+00> : vector<80x32xf32>
    %76 = tpu.matmul %74, %75, %cst_23 {dimension_numbers = #tpu.dot_dimension_numbers<[1], [0], [0], [1], [0, 0, 1, 1], [], []>} : vector<80x32xf32>, vector<32x32xf32>, vector<80x32xf32> -> vector<80x32xf32>
    %77 = vector.extract_strided_slice %2 {offsets = [0, 96], sizes = [1, 32], strides = [1, 1]} : vector<1x128xf32> to vector<1x32xf32>
    %78 = vector.broadcast %77 : vector<1x32xf32> to vector<80x32xf32>
    %79 = arith.addf %76, %78 : vector<80x32xf32>
    %c0_24 = arith.constant 0 : index
    %c0_25 = arith.constant 0 : index
    %80 = vector.load %arg5[%c0_24, %c0_25] : memref<8x80xf32, #tpu.memory_space<vmem>>, vector<8x80xf32>
    %cst_26 = arith.constant dense<0.000000e+00> : vector<8x32xf32>
    %81 = tpu.matmul %80, %79, %cst_26 {dimension_numbers = #tpu.dot_dimension_numbers<[1], [0], [0], [1], [0, 0, 1, 1], [], []>} : vector<8x80xf32>, vector<80x32xf32>, vector<8x32xf32> -> vector<8x32xf32>
    %cst_27 = arith.constant 9.99999997E-7 : f32
    %82 = vector.broadcast %cst_27 : f32 to vector<8x32xf32>
    %83 = arith.addf %81, %82 : vector<8x32xf32>
    %84 = arith.mulf %83, %83 : vector<8x32xf32>
    %cst_28 = arith.constant dense<0.000000e+00> : vector<8xf32>
    %85 = vector.multi_reduction <add>, %84, %cst_28 [1] : vector<8x32xf32> to vector<8xf32>
    %86 = vector.shape_cast %85 : vector<8xf32> to vector<8x1xf32>
    %87 = math.sqrt %86 : vector<8x1xf32>
    %cst_29 = arith.constant 0.000000e+00 : f32
    %88 = vector.broadcast %cst_29 : f32 to vector<8x1xf32>
    %89 = arith.subf %88, %87 : vector<8x1xf32>
    %c0_30 = arith.constant 0 : index
    %c0_31 = arith.constant 0 : index
    %90 = vector.load %arg6[%c0_30, %c0_31] : memref<8x1xf32, #tpu.memory_space<vmem>>, vector<8x1xf32>
    tpu.vector_store %arg6[%c0_30, %c0_31], %89 {strides = array<i32>} : memref<8x1xf32, #tpu.memory_space<vmem>>, vector<8x1xf32>,
    return
  }
  func.func @transform_0(%arg0: i32) -> (i32, i32) {
    %c0_i32 = arith.constant 0 : i32
    %c0_i32_0 = arith.constant 0 : i32
    return %arg0, %c0_i32 : i32, i32
  }
  func.func @transform_1(%arg0: i32) -> (i32, i32) {
    %c0_i32 = arith.constant 0 : i32
    %c0_i32_0 = arith.constant 0 : i32
    %c0_i32_1 = arith.constant 0 : i32
    return %c0_i32, %c0_i32_0 : i32, i32
  }
  func.func @transform_2(%arg0: i32) -> (i32, i32) {
    %c0_i32 = arith.constant 0 : i32
    %c0_i32_0 = arith.constant 0 : i32
    %c0_i32_1 = arith.constant 0 : i32
    return %c0_i32, %c0_i32_0 : i32, i32
  }
  func.func @transform_3(%arg0: i32) -> (i32, i32) {
    %c0_i32 = arith.constant 0 : i32
    %c0_i32_0 = arith.constant 0 : i32
    %c0_i32_1 = arith.constant 0 : i32
    return %c0_i32, %c0_i32_0 : i32, i32
  }
  func.func @transform_4(%arg0: i32) -> (i32, i32) {
    %c0_i32 = arith.constant 0 : i32
    %c0_i32_0 = arith.constant 0 : i32
    %c0_i32_1 = arith.constant 0 : i32
    return %c0_i32, %c0_i32_0 : i32, i32
  }
  func.func @transform_5(%arg0: i32) -> (i32, i32) {
    %c0_i32 = arith.constant 0 : i32
    %c0_i32_0 = arith.constant 0 : i32
    return %arg0, %c0_i32 : i32, i32
  }
}

</mosaic_0001>

<llo_original>
// kernel: tpu_custom_call.1
$region0: #{tpu_custom_call.1}
  #allocation0 [shape = 'u32[]', space=smem, size = 0x4, offset = 0x4, fixed_abs, tag = 'smem constant byte address 0x4 - core index']
  #allocation1 [shape = 'u32[144,128]{1,0:T(1,128)}', space=vmem, size = 0x12000, scoped, tag = 'internal scratch']
  %s0 = inlined_call_operand.vmem [shape: f32[80,32], index: 0, kind: input, shape index: {}]
  %s1 = inlined_call_operand.vmem [shape: f32[32,128], index: 1, kind: input, shape index: {}]
  %s2 = inlined_call_operand.vmem [shape: f32[1,128], index: 2, kind: input, shape index: {}]
  %s3 = inlined_call_operand.vmem [shape: f32[80,80], index: 3, kind: input, shape index: {}]
  %s4 = inlined_call_operand.vmem [shape: f32[8,80], index: 4, kind: input, shape index: {}]
  %s5 = inlined_call_operand.vmem [shape: f32[8,1], index: 5, kind: output, shape index: {}]
  %s6 = sld [smem:[#allocation0]]
  $region30: #{tpu_custom_call.1} parent=0
    _
  %s8 = ssub.s32 1, %s6
  %s9 = scalar_select 0, %s8, %s6
  // Predicated region
  $region2: #{tpu_custom_call.1} parent=0 // pred_check
    _
  $region3: #{tpu_custom_call.1} parent=0 // pred_check_branch
    %11 = sbr.rel (0) target = $region5
  $region4: #{tpu_custom_call.1} parent=0 // pred_region
    _
  $region5: #{tpu_custom_call.1} parent=0 // pred_fallthru
    _
  // Predicated region
  $region6: #{tpu_custom_call.1} parent=0 // pred_check
    _
  $region7: #{tpu_custom_call.1} parent=0 // pred_check_branch
    %13 = sbr.rel (0) target = $region9
  $region8: #{tpu_custom_call.1} parent=0 // pred_region
    _
  $region9: #{tpu_custom_call.1} parent=0 // pred_fallthru
    _
  // Predicated region
  $region10: #{tpu_custom_call.1} parent=0 // pred_check
    _
  $region11: #{tpu_custom_call.1} parent=0 // pred_check_branch
    %15 = sbr.rel (0) target = $region13
  $region12: #{tpu_custom_call.1} parent=0 // pred_region
    _
  $region13: #{tpu_custom_call.1} parent=0 // pred_fallthru
    _
  // Predicated region
  $region14: #{tpu_custom_call.1} parent=0 // pred_check
    _
  $region15: #{tpu_custom_call.1} parent=0 // pred_check_branch
    %17 = sbr.rel (0) target = $region17
  $region16: #{tpu_custom_call.1} parent=0 // pred_region
    _
  $region17: #{tpu_custom_call.1} parent=0 // pred_fallthru
    _
  // Predicated region
  $region18: #{tpu_custom_call.1} parent=0 // pred_check
    _
  $region19: #{tpu_custom_call.1} parent=0 // pred_check_branch
    %19 = sbr.rel (0) target = $region21
  $region20: #{tpu_custom_call.1} parent=0 // pred_region
    _
  $region21: #{tpu_custom_call.1} parent=0 // pred_fallthru
    _
  %v20 = vld [vmem:[%s0] sm:$0xff]
  %v21 = vld [vmem:[%s0 + $0x8] sm:$0xff]
  %v22 = vld [vmem:[%s0 + $0x10] sm:$0xff]
  %v23 = vld [vmem:[%s0 + $0x18] sm:$0xff]
  %v24 = vld [vmem:[%s0 + $0x20] sm:$0xff]
  %v25 = vld [vmem:[%s0 + $0x28] sm:$0xff]
  %v26 = vld [vmem:[%s0 + $0x30] sm:$0xff]
  %v27 = vld [vmem:[%s0 + $0x38] sm:$0xff]
  %v28 = vld [vmem:[%s0 + $0x40] sm:$0xff]
  %v29 = vld [vmem:[%s0 + $0x48] sm:$0xff]
  %v30 = vld [vmem:[%s1] sm:$0xff]
  %v31 = vld [vmem:[%s1 + $0x8] sm:$0xff]
  %v32 = vld [vmem:[%s1 + $0x10] sm:$0xff]
  %v33 = vld [vmem:[%s1 + $0x18] sm:$0xff]
  %v34 = vld [vmem:[%s2] sm:$0x1]
  %v36 = vlaneseq
  %v37 = vshrl.u32 %v36, 7
  %v38 = vsub.s32 0, %v37
  %v39 = vrot.slane %v34, %v38
  %vm41 = vcmask 261120
  %v43 = vsel %vm41, %v20, 0
  %v46 = vsel %vm41, %v21, 0
  %v49 = vsel %vm41, %v22, 0
  %v52 = vsel %vm41, %v23, 0
  %v55 = vsel %vm41, %v24, 0
  %v58 = vsel %vm41, %v25, 0
  %v61 = vsel %vm41, %v26, 0
  %v64 = vsel %vm41, %v27, 0
  %v67 = vsel %vm41, %v28, 0
  %v70 = vsel %vm41, %v29, 0
  %72 = vmatprep.subr.mxu0 0.0
  %73 = vmatpush1.msra.mxu0 %v30
  %74 = vmatprep.subr.mxu0 0.0
  %75 = vmatpush1.msra.mxu0 %v31
  %76 = vmatprep.subr.mxu0 0.0
  %77 = vmatpush1.msra.mxu0 %v32
  %78 = vmatprep.subr.mxu0 0.0
  %79 = vmatpush1.msra.mxu0 %v33
  %80 = vmatprep.subr.mxu0 0.0
  %81 = vmatpush1.msra.mxu0 0.0
  %82 = vmatprep.subr.mxu0 0.0
  %83 = vmatpush1.msra.mxu0 0.0
  %84 = vmatprep.subr.mxu0 0.0
  %85 = vmatpush1.msra.mxu0 0.0
  %86 = vmatprep.subr.mxu0 0.0
  %87 = vmatpush1.msra.mxu0 0.0
  %88 = vmatprep.subr.mxu0 0.0
  %89 = vmatpush1.msra.mxu0 0.0
  %90 = vmatprep.subr.mxu0 0.0
  %91 = vmatpush1.msra.mxu0 0.0
  %92 = vmatprep.subr.mxu0 0.0
  %93 = vmatpush1.msra.mxu0 0.0
  %94 = vmatprep.subr.mxu0 0.0
  %95 = vmatpush1.msra.mxu0 0.0
  %96 = vmatprep.subr.mxu0 0.0
  %97 = vmatpush1.msra.mxu0 0.0
  %98 = vmatprep.subr.mxu0 0.0
  %99 = vmatpush1.msra.mxu0 0.0
  %100 = vmatprep.subr.mxu0 0.0
  %101 = vmatpush1.msra.mxu0 0.0
  %102 = vmatprep.subr.mxu0 0.0
  %103 = vmatpush1.msra.mxu0 0.0
  %104 = vmatprep.subr.mxu0 0.0
  %105 = vmatpush1.msra.mxu0 0.0
  %106 = vmatprep.subr.mxu0 0.0
  %107 = vmatpush1.msra.mxu0 0.0
  %108 = vmatprep.subr.mxu0 0.0
  %109 = vmatpush1.msra.mxu0 0.0
  %110 = vmatprep.subr.mxu0 0.0
  %111 = vmatpush1.msra.mxu0 0.0
  %112 = vmatprep.subr.mxu0 0.0
  %113 = vmatpush1.msra.mxu0 0.0
  %114 = vmatprep.subr.mxu0 0.0
  %115 = vmatpush1.msra.mxu0 0.0
  %116 = vmatprep.subr.mxu0 0.0
  %117 = vmatpush1.msra.mxu0 0.0
  %118 = vmatprep.subr.mxu0 0.0
  %119 = vmatpush1.msra.mxu0 0.0
  %120 = vmatprep.subr.mxu0 0.0
  %121 = vmatpush1.msra.mxu0 0.0
  %122 = vmatprep.subr.mxu0 0.0
  %123 = vmatpush1.msra.mxu0 0.0
  %124 = vmatprep.subr.mxu0 0.0
  %125 = vmatpush1.msra.mxu0 0.0
  %126 = vmatprep.subr.mxu0 0.0
  %127 = vmatpush1.msra.mxu0 0.0
  %128 = vmatprep.subr.mxu0 0.0
  %129 = vmatpush1.msra.mxu0 0.0
  %130 = vmatprep.subr.mxu0 0.0
  %131 = vmatpush1.msra.mxu0 0.0
  %132 = vmatprep.subr.mxu0 0.0
  %133 = vmatpush1.msra.mxu0 0.0
  %134 = vmatprep.subr.mxu0 0.0
  %135 = vmatpush1.msra.mxu0 0.0
  %136 = vmatprep.mubr.f32.mxu0 0.0
  %137 = vmatmul.mubr.f32.gmra.mrb[0].mxu0 %v43
  %v138 = vpop.f32.mrb[0].mxu0
  %v139 = vadd.f32 %v39, %v138
  %v140 = vpop.f32.mrb[0].mxu0
  %141 = vmatprep.mubr.f32.mxu0 0.0
  %142 = vmatmul.mubr.f32.gmra.mrb[0].mxu0 %v46
  %v143 = vpop.f32.mrb[0].mxu0
  %v144 = vadd.f32 %v39, %v143
  %v145 = vpop.f32.mrb[0].mxu0
  %146 = vmatprep.mubr.f32.mxu0 0.0
  %147 = vmatmul.mubr.f32.gmra.mrb[0].mxu0 %v49
  %v148 = vpop.f32.mrb[0].mxu0
  %v149 = vadd.f32 %v39, %v148
  %v150 = vpop.f32.mrb[0].mxu0
  %151 = vmatprep.mubr.f32.mxu0 0.0
  %152 = vmatmul.mubr.f32.gmra.mrb[0].mxu0 %v52
  %v153 = vpop.f32.mrb[0].mxu0
  %v154 = vadd.f32 %v39, %v153
  %v155 = vpop.f32.mrb[0].mxu0
  %156 = vmatprep.mubr.f32.mxu0 0.0
  %157 = vmatmul.mubr.f32.gmra.mrb[0].mxu0 %v55
  %v158 = vpop.f32.mrb[0].mxu0
  %v159 = vadd.f32 %v39, %v158
  %v160 = vpop.f32.mrb[0].mxu0
  %161 = vmatprep.mubr.f32.mxu0 0.0
  %162 = vmatmul.mubr.f32.gmra.mrb[0].mxu0 %v58
  %v163 = vpop.f32.mrb[0].mxu0
  %v164 = vadd.f32 %v39, %v163
  %v165 = vpop.f32.mrb[0].mxu0
  %166 = vmatprep.mubr.f32.mxu0 0.0
  %167 = vmatmul.mubr.f32.gmra.mrb[0].mxu0 %v61
  %v168 = vpop.f32.mrb[0].mxu0
  %v169 = vadd.f32 %v39, %v168
  %v170 = vpop.f32.mrb[0].mxu0
  %171 = vmatprep.mubr.f32.mxu0 0.0
  %172 = vmatmul.mubr.f32.gmra.mrb[0].mxu0 %v64
  %v173 = vpop.f32.mrb[0].mxu0
  %v174 = vadd.f32 %v39, %v173
  %v175 = vpop.f32.mrb[0].mxu0
  %176 = vmatprep.mubr.f32.mxu0 0.0
  %177 = vmatmul.mubr.f32.gmra.mrb[0].mxu0 %v67
  %v178 = vpop.f32.mrb[0].mxu0
  %v179 = vadd.f32 %v39, %v178
  %v180 = vpop.f32.mrb[0].mxu0
  %181 = vmatprep.mubr.f32.mxu0 0.0
  %182 = vmatmul.mubr.f32.gmra.mrb[0].mxu0 %v70
  %v183 = vpop.f32.mrb[0].mxu0
  %v184 = vadd.f32 %v39, %v183
  %v185 = vpop.f32.mrb[0].mxu0
  %186 = vdwg.mxu0
  %v187 = vld [vmem:[%s3] sm:$0xff]
  %v188 = vld [vmem:[%s3 + $0x8] sm:$0xff]
  %v189 = vld [vmem:[%s3 + $0x10] sm:$0xff]
  %v190 = vld [vmem:[%s3 + $0x18] sm:$0xff]
  %v191 = vld [vmem:[%s3 + $0x20] sm:$0xff]
  %v192 = vld [vmem:[%s3 + $0x28] sm:$0xff]
  %v193 = vld [vmem:[%s3 + $0x30] sm:$0xff]
  %v194 = vld [vmem:[%s3 + $0x38] sm:$0xff]
  %v195 = vld [vmem:[%s3 + $0x40] sm:$0xff]
  %v196 = vld [vmem:[%s3 + $0x48] sm:$0xff]
  %207 = vrot.lane.b32.xlu0 %v139, 96
  %v208 = vpop.permute.xlu0 %207
  %209 = vrot.lane.b32.xlu0 %v144, 96
  %v210 = vpop.permute.xlu0 %209
  %211 = vrot.lane.b32.xlu0 %v149, 96
  %v212 = vpop.permute.xlu0 %211
  %213 = vrot.lane.b32.xlu0 %v154, 96
  %v214 = vpop.permute.xlu0 %213
  %215 = vrot.lane.b32.xlu0 %v159, 96
  %v216 = vpop.permute.xlu0 %215
  %217 = vrot.lane.b32.xlu0 %v164, 96
  %v218 = vpop.permute.xlu0 %217
  %219 = vrot.lane.b32.xlu0 %v169, 96
  %v220 = vpop.permute.xlu0 %219
  %221 = vrot.lane.b32.xlu0 %v174, 96
  %v222 = vpop.permute.xlu0 %221
  %223 = vrot.lane.b32.xlu0 %v179, 96
  %v224 = vpop.permute.xlu0 %223
  %225 = vrot.lane.b32.xlu0 %v184, 96
  %v226 = vpop.permute.xlu0 %225
  %vm227 = vcmask 64512
  %v228 = vsel %vm227, %v139, 0
  %v230 = vsel %vm227, %v144, 0
  %v232 = vsel %vm227, %v149, 0
  %v234 = vsel %vm227, %v154, 0
  %v236 = vsel %vm227, %v159, 0
  %v238 = vsel %vm227, %v164, 0
  %v240 = vsel %vm227, %v169, 0
  %v242 = vsel %vm227, %v174, 0
  %v244 = vsel %vm227, %v179, 0
  %v246 = vsel %vm227, %v184, 0
  %v248 = vsel %vm227, %v208, 0
  %v250 = vsel %vm227, %v210, 0
  %v252 = vsel %vm227, %v212, 0
  %v254 = vsel %vm227, %v214, 0
  %v256 = vsel %vm227, %v216, 0
  %v258 = vsel %vm227, %v218, 0
  %v260 = vsel %vm227, %v220, 0
  %v262 = vsel %vm227, %v222, 0
  %v264 = vsel %vm227, %v224, 0
  %v266 = vsel %vm227, %v226, 0
  %268 = vmatprep.subr.mxu0 0.0
  %269 = vmatpush1.xpose.msra.mxu0 %v248
  %270 = vmatprep.subr.mxu0 0.0
  %271 = vmatpush1.xpose.msra.mxu0 %v250
  %272 = vmatprep.subr.mxu0 0.0
  %273 = vmatpush1.xpose.msra.mxu0 %v252
  %274 = vmatprep.subr.mxu0 0.0
  %275 = vmatpush1.xpose.msra.mxu0 %v254
  %276 = vmatprep.subr.mxu0 0.0
  %277 = vmatpush1.xpose.msra.mxu0 %v256
  %278 = vmatprep.subr.mxu0 0.0
  %279 = vmatpush1.xpose.msra.mxu0 %v258
  %280 = vmatprep.subr.mxu0 0.0
  %281 = vmatpush1.xpose.msra.mxu0 %v260
  %282 = vmatprep.subr.mxu0 0.0
  %283 = vmatpush1.xpose.msra.mxu0 %v262
  %284 = vmatprep.subr.mxu0 0.0
  %285 = vmatpush1.xpose.msra.mxu0 %v264
  %286 = vmatprep.subr.mxu0 0.0
  %287 = vmatpush1.xpose.msra.mxu0 %v266
  %288 = vmatprep.subr.mxu0 0.0
  %289 = vmatpush1.xpose.msra.mxu0 0.0
  %290 = vmatprep.subr.mxu0 0.0
  %291 = vmatpush1.xpose.msra.mxu0 0.0
  %292 = vmatprep.subr.mxu0 0.0
  %293 = vmatpush1.xpose.msra.mxu0 0.0
  %294 = vmatprep.subr.mxu0 0.0
  %295 = vmatpush1.xpose.msra.mxu0 0.0
  %296 = vmatprep.subr.mxu0 0.0
  %297 = vmatpush1.xpose.msra.mxu0 0.0
  %298 = vmatprep.subr.mxu0 0.0
  %299 = vmatpush1.xpose.msra.mxu0 0.0
  %300 = vmatprep.subr.mxu0 0.0
  %301 = vmatpush1.xpose.msra.mxu0 0.0
  %302 = vmatprep.subr.mxu0 0.0
  %303 = vmatpush1.xpose.msra.mxu0 0.0
  %304 = vmatprep.subr.mxu0 0.0
  %305 = vmatpush1.xpose.msra.mxu0 0.0
  %306 = vmatprep.subr.mxu0 0.0
  %307 = vmatpush1.xpose.msra.mxu0 0.0
  %308 = vmatprep.subr.mxu0 0.0
  %309 = vmatpush1.xpose.msra.mxu0 0.0
  %310 = vmatprep.subr.mxu0 0.0
  %311 = vmatpush1.xpose.msra.mxu0 0.0
  %312 = vmatprep.subr.mxu0 0.0
  %313 = vmatpush1.xpose.msra.mxu0 0.0
  %314 = vmatprep.subr.mxu0 0.0
  %315 = vmatpush1.xpose.msra.mxu0 0.0
  %316 = vmatprep.subr.mxu0 0.0
  %317 = vmatpush1.xpose.msra.mxu0 0.0
  %318 = vmatprep.subr.mxu0 0.0
  %319 = vmatpush1.xpose.msra.mxu0 0.0
  %320 = vmatprep.subr.mxu0 0.0
  %321 = vmatpush1.xpose.msra.mxu0 0.0
  %322 = vmatprep.subr.mxu0 0.0
  %323 = vmatpush1.xpose.msra.mxu0 0.0
  %324 = vmatprep.subr.mxu0 0.0
  %325 = vmatpush1.xpose.msra.mxu0 0.0
  %326 = vmatprep.subr.mxu0 0.0
  %327 = vmatpush1.xpose.msra.mxu0 0.0
  %328 = vmatprep.subr.mxu0 0.0
  %329 = vmatpush1.xpose.msra.mxu0 0.0
  %330 = vmatprep.subr.mxu0 0.0
  %331 = vmatpush1.xpose.msra.mxu0 0.0
  %332 = vmatprep.mubr.f32.mxu0 0.0
  %333 = vmatmul.mubr.f32.gmra.mrb[0].mxu0 %v228
  %v334 = vpop.f32.mrb[0].mxu0
  %v335 = vadd.f32 %v187, %v334
  %v336 = vpop.f32.mrb[0].mxu0
  %337 = vmatprep.mubr.f32.mxu0 0.0
  %338 = vmatmul.mubr.f32.gmra.mrb[0].mxu0 %v230
  %v339 = vpop.f32.mrb[0].mxu0
  %v340 = vadd.f32 %v188, %v339
  %v341 = vpop.f32.mrb[0].mxu0
  %342 = vmatprep.mubr.f32.mxu0 0.0
  %343 = vmatmul.mubr.f32.gmra.mrb[0].mxu0 %v232
  %v344 = vpop.f32.mrb[0].mxu0
  %v345 = vadd.f32 %v189, %v344
  %v346 = vpop.f32.mrb[0].mxu0
  %347 = vmatprep.mubr.f32.mxu0 0.0
  %348 = vmatmul.mubr.f32.gmra.mrb[0].mxu0 %v234
  %v349 = vpop.f32.mrb[0].mxu0
  %v350 = vadd.f32 %v190, %v349
  %v351 = vpop.f32.mrb[0].mxu0
  %352 = vmatprep.mubr.f32.mxu0 0.0
  %353 = vmatmul.mubr.f32.gmra.mrb[0].mxu0 %v236
  %v354 = vpop.f32.mrb[0].mxu0
  %v355 = vadd.f32 %v191, %v354
  %v356 = vpop.f32.mrb[0].mxu0
  %357 = vmatprep.mubr.f32.mxu0 0.0
  %358 = vmatmul.mubr.f32.gmra.mrb[0].mxu0 %v238
  %v359 = vpop.f32.mrb[0].mxu0
  %v360 = vadd.f32 %v192, %v359
  %v361 = vpop.f32.mrb[0].mxu0
  %362 = vmatprep.mubr.f32.mxu0 0.0
  %363 = vmatmul.mubr.f32.gmra.mrb[0].mxu0 %v240
  %v364 = vpop.f32.mrb[0].mxu0
  %v365 = vadd.f32 %v193, %v364
  %v366 = vpop.f32.mrb[0].mxu0
  %367 = vmatprep.mubr.f32.mxu0 0.0
  %368 = vmatmul.mubr.f32.gmra.mrb[0].mxu0 %v242
  %v369 = vpop.f32.mrb[0].mxu0
  %v370 = vadd.f32 %v194, %v369
  %v371 = vpop.f32.mrb[0].mxu0
  %372 = vmatprep.mubr.f32.mxu0 0.0
  %373 = vmatmul.mubr.f32.gmra.mrb[0].mxu0 %v244
  %v374 = vpop.f32.mrb[0].mxu0
  %v375 = vadd.f32 %v195, %v374
  %v376 = vpop.f32.mrb[0].mxu0
  %377 = vmatprep.mubr.f32.mxu0 0.0
  %378 = vmatmul.mubr.f32.gmra.mrb[0].mxu0 %v246
  %v379 = vpop.f32.mrb[0].mxu0
  %v380 = vadd.f32 %v196, %v379
  %v381 = vpop.f32.mrb[0].mxu0
  %382 = vdwg.mxu0
  %vm383 = vcmask 654336
  %v384 = vsel %vm383, %v335, -inf
  %385 = vmax.xlane.f32.xlu0 %v384
  %v386 = vpop.xlane.xlu0 %385
  %v387 = vsel %vm383, %v340, -inf
  %388 = vmax.xlane.f32.xlu0 %v387
  %v389 = vpop.xlane.xlu0 %388
  %v390 = vsel %vm383, %v345, -inf
  %391 = vmax.xlane.f32.xlu0 %v390
  %v392 = vpop.xlane.xlu0 %391
  %v393 = vsel %vm383, %v350, -inf
  %394 = vmax.xlane.f32.xlu0 %v393
  %v395 = vpop.xlane.xlu0 %394
  %v396 = vsel %vm383, %v355, -inf
  %397 = vmax.xlane.f32.xlu0 %v396
  %v398 = vpop.xlane.xlu0 %397
  %v399 = vsel %vm383, %v360, -inf
  %400 = vmax.xlane.f32.xlu0 %v399
  %v401 = vpop.xlane.xlu0 %400
  %v402 = vsel %vm383, %v365, -inf
  %403 = vmax.xlane.f32.xlu0 %v402
  %v404 = vpop.xlane.xlu0 %403
  %v405 = vsel %vm383, %v370, -inf
  %406 = vmax.xlane.f32.xlu0 %v405
  %v407 = vpop.xlane.xlu0 %406
  %v408 = vsel %vm383, %v375, -inf
  %409 = vmax.xlane.f32.xlu0 %v408
  %v410 = vpop.xlane.xlu0 %409
  %v411 = vsel %vm383, %v380, -inf
  %412 = vmax.xlane.f32.xlu0 %v411
  %v413 = vpop.xlane.xlu0 %412
  %v414 = vsub.f32 %v335, %v386
  %v415 = vsub.f32 %v340, %v389
  %v416 = vsub.f32 %v345, %v392
  %v417 = vsub.f32 %v350, %v395
  %v418 = vsub.f32 %v355, %v398
  %v419 = vsub.f32 %v360, %v401
  %v420 = vsub.f32 %v365, %v404
  %v421 = vsub.f32 %v370, %v407
  %v422 = vsub.f32 %v375, %v410
  %v423 = vsub.f32 %v380, %v413
  %v424 = vmul.f32 %v414, 1.442695
  %v425 = vpow.pop %v424
  %v426 = vmul.f32 %v415, 1.442695
  %v427 = vpow.pop %v426
  %v428 = vmul.f32 %v416, 1.442695
  %v429 = vpow.pop %v428
  %v430 = vmul.f32 %v417, 1.442695
  %v431 = vpow.pop %v430
  %v432 = vmul.f32 %v418, 1.442695
  %v433 = vpow.pop %v432
  %v434 = vmul.f32 %v419, 1.442695
  %v435 = vpow.pop %v434
  %v436 = vmul.f32 %v420, 1.442695
  %v437 = vpow.pop %v436
  %v438 = vmul.f32 %v421, 1.442695
  %v439 = vpow.pop %v438
  %v440 = vmul.f32 %v422, 1.442695
  %v441 = vpow.pop %v440
  %v442 = vmul.f32 %v423, 1.442695
  %v443 = vpow.pop %v442
  %v444 = vsel %vm383, %v425, 0.0
  %445 = vadd.xlane.f32.xlu0 %v444
  %v446 = vpop.xlane.xlu0 %445
  %v447 = vsel %vm383, %v427, 0.0
  %448 = vadd.xlane.f32.xlu0 %v447
  %v449 = vpop.xlane.xlu0 %448
  %v450 = vsel %vm383, %v429, 0.0
  %451 = vadd.xlane.f32.xlu0 %v450
  %v452 = vpop.xlane.xlu0 %451
  %v453 = vsel %vm383, %v431, 0.0
  %454 = vadd.xlane.f32.xlu0 %v453
  %v455 = vpop.xlane.xlu0 %454
  %v456 = vsel %vm383, %v433, 0.0
  %457 = vadd.xlane.f32.xlu0 %v456
  %v458 = vpop.xlane.xlu0 %457
  %v459 = vsel %vm383, %v435, 0.0
  %460 = vadd.xlane.f32.xlu0 %v459
  %v461 = vpop.xlane.xlu0 %460
  %v462 = vsel %vm383, %v437, 0.0
  %463 = vadd.xlane.f32.xlu0 %v462
  %v464 = vpop.xlane.xlu0 %463
  %v465 = vsel %vm383, %v439, 0.0
  %466 = vadd.xlane.f32.xlu0 %v465
  %v467 = vpop.xlane.xlu0 %466
  %v468 = vsel %vm383, %v441, 0.0
  %469 = vadd.xlane.f32.xlu0 %v468
  %v470 = vpop.xlane.xlu0 %469
  %v471 = vsel %vm383, %v443, 0.0
  %472 = vadd.xlane.f32.xlu0 %v471
  %v473 = vpop.xlane.xlu0 %472
  %v474 = vrcp.pop %v446
  %v475 = vrcp.pop %v449
  %v476 = vrcp.pop %v452
  %v477 = vrcp.pop %v455
  %v478 = vrcp.pop %v458
  %v479 = vrcp.pop %v461
  %v480 = vrcp.pop %v464
  %v481 = vrcp.pop %v467
  %v482 = vrcp.pop %v470
  %v483 = vrcp.pop %v473
  %v484 = vmul.f32 %v425, %v474
  %v485 = vmul.f32 %v427, %v475
  %v486 = vmul.f32 %v429, %v476
  %v487 = vmul.f32 %v431, %v477
  %v488 = vmul.f32 %v433, %v478
  %v489 = vmul.f32 %v435, %v479
  %v490 = vmul.f32 %v437, %v480
  %v491 = vmul.f32 %v439, %v481
  %v492 = vmul.f32 %v441, %v482
  %v493 = vmul.f32 %v443, %v483
  %494 = vrot.lane.b32.xlu0 %v139, 64
  %v495 = vpop.permute.xlu0 %494
  %496 = vrot.lane.b32.xlu0 %v144, 64
  %v497 = vpop.permute.xlu0 %496
  %498 = vrot.lane.b32.xlu0 %v149, 64
  %v499 = vpop.permute.xlu0 %498
  %500 = vrot.lane.b32.xlu0 %v154, 64
  %v501 = vpop.permute.xlu0 %500
  %502 = vrot.lane.b32.xlu0 %v159, 64
  %v503 = vpop.permute.xlu0 %502
  %504 = vrot.lane.b32.xlu0 %v164, 64
  %v505 = vpop.permute.xlu0 %504
  %506 = vrot.lane.b32.xlu0 %v169, 64
  %v507 = vpop.permute.xlu0 %506
  %508 = vrot.lane.b32.xlu0 %v174, 64
  %v509 = vpop.permute.xlu0 %508
  %510 = vrot.lane.b32.xlu0 %v179, 64
  %v511 = vpop.permute.xlu0 %510
  %512 = vrot.lane.b32.xlu0 %v184, 64
  %v513 = vpop.permute.xlu0 %512
  %v525 = vsel %vm383, %v484, 0
  %v528 = vsel %vm383, %v485, 0
  %v531 = vsel %vm383, %v486, 0
  %v534 = vsel %vm383, %v487, 0
  %v537 = vsel %vm383, %v488, 0
  %v540 = vsel %vm383, %v489, 0
  %v543 = vsel %vm383, %v490, 0
  %v546 = vsel %vm383, %v491, 0
  %v549 = vsel %vm383, %v492, 0
  %v552 = vsel %vm383, %v493, 0
  %554 = vmatprep.subr.mxu0 0.0
  %555 = vmatpush1.msra.mxu0 %v495
  %556 = vmatprep.subr.mxu0 0.0
  %557 = vmatpush1.msra.mxu0 %v497
  %558 = vmatprep.subr.mxu0 0.0
  %559 = vmatpush1.msra.mxu0 %v499
  %560 = vmatprep.subr.mxu0 0.0
  %561 = vmatpush1.msra.mxu0 %v501
  %562 = vmatprep.subr.mxu0 0.0
  %563 = vmatpush1.msra.mxu0 %v503
  %564 = vmatprep.subr.mxu0 0.0
  %565 = vmatpush1.msra.mxu0 %v505
  %566 = vmatprep.subr.mxu0 0.0
  %567 = vmatpush1.msra.mxu0 %v507
  %568 = vmatprep.subr.mxu0 0.0
  %569 = vmatpush1.msra.mxu0 %v509
  %570 = vmatprep.subr.mxu0 0.0
  %571 = vmatpush1.msra.mxu0 %v511
  %572 = vmatprep.subr.mxu0 0.0
  %573 = vmatpush1.msra.mxu0 %v513
  %574 = vmatprep.subr.mxu0 0.0
  %575 = vmatpush1.msra.mxu0 0.0
  %576 = vmatprep.subr.mxu0 0.0
  %577 = vmatpush1.msra.mxu0 0.0
  %578 = vmatprep.subr.mxu0 0.0
  %579 = vmatpush1.msra.mxu0 0.0
  %580 = vmatprep.subr.mxu0 0.0
  %581 = vmatpush1.msra.mxu0 0.0
  %582 = vmatprep.subr.mxu0 0.0
  %583 = vmatpush1.msra.mxu0 0.0
  %584 = vmatprep.subr.mxu0 0.0
  %585 = vmatpush1.msra.mxu0 0.0
  %586 = vmatprep.subr.mxu0 0.0
  %587 = vmatpush1.msra.mxu0 0.0
  %588 = vmatprep.subr.mxu0 0.0
  %589 = vmatpush1.msra.mxu0 0.0
  %590 = vmatprep.subr.mxu0 0.0
  %591 = vmatpush1.msra.mxu0 0.0
  %592 = vmatprep.subr.mxu0 0.0
  %593 = vmatpush1.msra.mxu0 0.0
  %594 = vmatprep.subr.mxu0 0.0
  %595 = vmatpush1.msra.mxu0 0.0
  %596 = vmatprep.subr.mxu0 0.0
  %597 = vmatpush1.msra.mxu0 0.0
  %598 = vmatprep.subr.mxu0 0.0
  %599 = vmatpush1.msra.mxu0 0.0
  %600 = vmatprep.subr.mxu0 0.0
  %601 = vmatpush1.msra.mxu0 0.0
  %602 = vmatprep.subr.mxu0 0.0
  %603 = vmatpush1.msra.mxu0 0.0
  %604 = vmatprep.subr.mxu0 0.0
  %605 = vmatpush1.msra.mxu0 0.0
  %606 = vmatprep.subr.mxu0 0.0
  %607 = vmatpush1.msra.mxu0 0.0
  %608 = vmatprep.subr.mxu0 0.0
  %609 = vmatpush1.msra.mxu0 0.0
  %610 = vmatprep.subr.mxu0 0.0
  %611 = vmatpush1.msra.mxu0 0.0
  %612 = vmatprep.subr.mxu0 0.0
  %613 = vmatpush1.msra.mxu0 0.0
  %614 = vmatprep.subr.mxu0 0.0
  %615 = vmatpush1.msra.mxu0 0.0
  %616 = vmatprep.subr.mxu0 0.0
  %617 = vmatpush1.msra.mxu0 0.0
  %618 = vmatprep.mubr.f32.mxu0 0.0
  %619 = vmatmul.mubr.f32.gmra.mrb[0].mxu0 %v525
  %v620 = vpop.f32.mrb[0].mxu0
  %v621 = vadd.f32 0.0, %v620
  %v622 = vpop.f32.mrb[0].mxu0
  %623 = vmatprep.mubr.f32.mxu0 0.0
  %624 = vmatmul.mubr.f32.gmra.mrb[0].mxu0 %v528
  %v625 = vpop.f32.mrb[0].mxu0
  %v626 = vadd.f32 0.0, %v625
  %v627 = vpop.f32.mrb[0].mxu0
  %628 = vmatprep.mubr.f32.mxu0 0.0
  %629 = vmatmul.mubr.f32.gmra.mrb[0].mxu0 %v531
  %v630 = vpop.f32.mrb[0].mxu0
  %v631 = vadd.f32 0.0, %v630
  %v632 = vpop.f32.mrb[0].mxu0
  %633 = vmatprep.mubr.f32.mxu0 0.0
  %634 = vmatmul.mubr.f32.gmra.mrb[0].mxu0 %v534
  %v635 = vpop.f32.mrb[0].mxu0
  %v636 = vadd.f32 0.0, %v635
  %v637 = vpop.f32.mrb[0].mxu0
  %638 = vmatprep.mubr.f32.mxu0 0.0
  %639 = vmatmul.mubr.f32.gmra.mrb[0].mxu0 %v537
  %v640 = vpop.f32.mrb[0].mxu0
  %v641 = vadd.f32 0.0, %v640
  %v642 = vpop.f32.mrb[0].mxu0
  %643 = vmatprep.mubr.f32.mxu0 0.0
  %644 = vmatmul.mubr.f32.gmra.mrb[0].mxu0 %v540
  %v645 = vpop.f32.mrb[0].mxu0
  %v646 = vadd.f32 0.0, %v645
  %v647 = vpop.f32.mrb[0].mxu0
  %648 = vmatprep.mubr.f32.mxu0 0.0
  %649 = vmatmul.mubr.f32.gmra.mrb[0].mxu0 %v543
  %v650 = vpop.f32.mrb[0].mxu0
  %v651 = vadd.f32 0.0, %v650
  %v652 = vpop.f32.mrb[0].mxu0
  %653 = vmatprep.mubr.f32.mxu0 0.0
  %654 = vmatmul.mubr.f32.gmra.mrb[0].mxu0 %v546
  %v655 = vpop.f32.mrb[0].mxu0
  %v656 = vadd.f32 0.0, %v655
  %v657 = vpop.f32.mrb[0].mxu0
  %658 = vmatprep.mubr.f32.mxu0 0.0
  %659 = vmatmul.mubr.f32.gmra.mrb[0].mxu0 %v549
  %v660 = vpop.f32.mrb[0].mxu0
  %v661 = vadd.f32 0.0, %v660
  %v662 = vpop.f32.mrb[0].mxu0
  %663 = vmatprep.mubr.f32.mxu0 0.0
  %664 = vmatmul.mubr.f32.gmra.mrb[0].mxu0 %v552
  %v665 = vpop.f32.mrb[0].mxu0
  %v666 = vadd.f32 0.0, %v665
  %v667 = vpop.f32.mrb[0].mxu0
  %668 = vdwg.mxu0
  %669 = vrot.lane.b32.xlu0 %v139, 120
  %v670 = vpop.permute.xlu0 %669
  %671 = vrot.lane.b32.xlu0 %v144, 120
  %v672 = vpop.permute.xlu0 %671
  %673 = vrot.lane.b32.xlu0 %v149, 120
  %v674 = vpop.permute.xlu0 %673
  %675 = vrot.lane.b32.xlu0 %v154, 120
  %v676 = vpop.permute.xlu0 %675
  %677 = vrot.lane.b32.xlu0 %v159, 120
  %v678 = vpop.permute.xlu0 %677
  %679 = vrot.lane.b32.xlu0 %v164, 120
  %v680 = vpop.permute.xlu0 %679
  %681 = vrot.lane.b32.xlu0 %v169, 120
  %v682 = vpop.permute.xlu0 %681
  %683 = vrot.lane.b32.xlu0 %v174, 120
  %v684 = vpop.permute.xlu0 %683
  %685 = vrot.lane.b32.xlu0 %v179, 120
  %v686 = vpop.permute.xlu0 %685
  %687 = vrot.lane.b32.xlu0 %v184, 120
  %v688 = vpop.permute.xlu0 %687
  %689 = vrot.lane.b32.xlu0 %v139, 88
  %v690 = vpop.permute.xlu0 %689
  %691 = vrot.lane.b32.xlu0 %v144, 88
  %v692 = vpop.permute.xlu0 %691
  %693 = vrot.lane.b32.xlu0 %v149, 88
  %v694 = vpop.permute.xlu0 %693
  %695 = vrot.lane.b32.xlu0 %v154, 88
  %v696 = vpop.permute.xlu0 %695
  %697 = vrot.lane.b32.xlu0 %v159, 88
  %v698 = vpop.permute.xlu0 %697
  %699 = vrot.lane.b32.xlu0 %v164, 88
  %v700 = vpop.permute.xlu0 %699
  %701 = vrot.lane.b32.xlu0 %v169, 88
  %v702 = vpop.permute.xlu0 %701
  %703 = vrot.lane.b32.xlu0 %v174, 88
  %v704 = vpop.permute.xlu0 %703
  %705 = vrot.lane.b32.xlu0 %v179, 88
  %v706 = vpop.permute.xlu0 %705
  %707 = vrot.lane.b32.xlu0 %v184, 88
  %v708 = vpop.permute.xlu0 %707
  %v709 = vsel %vm227, %v670, 0
  %v711 = vsel %vm227, %v672, 0
  %v713 = vsel %vm227, %v674, 0
  %v715 = vsel %vm227, %v676, 0
  %v717 = vsel %vm227, %v678, 0
  %v719 = vsel %vm227, %v680, 0
  %v721 = vsel %vm227, %v682, 0
  %v723 = vsel %vm227, %v684, 0
  %v725 = vsel %vm227, %v686, 0
  %v727 = vsel %vm227, %v688, 0
  %v729 = vsel %vm227, %v690, 0
  %v731 = vsel %vm227, %v692, 0
  %v733 = vsel %vm227, %v694, 0
  %v735 = vsel %vm227, %v696, 0
  %v737 = vsel %vm227, %v698, 0
  %v739 = vsel %vm227, %v700, 0
  %v741 = vsel %vm227, %v702, 0
  %v743 = vsel %vm227, %v704, 0
  %v745 = vsel %vm227, %v706, 0
  %v747 = vsel %vm227, %v708, 0
  %749 = vmatprep.subr.mxu0 0.0
  %750 = vmatpush1.xpose.msra.mxu0 %v729
  %751 = vmatprep.subr.mxu0 0.0
  %752 = vmatpush1.xpose.msra.mxu0 %v731
  %753 = vmatprep.subr.mxu0 0.0
  %754 = vmatpush1.xpose.msra.mxu0 %v733
  %755 = vmatprep.subr.mxu0 0.0
  %756 = vmatpush1.xpose.msra.mxu0 %v735
  %757 = vmatprep.subr.mxu0 0.0
  %758 = vmatpush1.xpose.msra.mxu0 %v737
  %759 = vmatprep.subr.mxu0 0.0
  %760 = vmatpush1.xpose.msra.mxu0 %v739
  %761 = vmatprep.subr.mxu0 0.0
  %762 = vmatpush1.xpose.msra.mxu0 %v741
  %763 = vmatprep.subr.mxu0 0.0
  %764 = vmatpush1.xpose.msra.mxu0 %v743
  %765 = vmatprep.subr.mxu0 0.0
  %766 = vmatpush1.xpose.msra.mxu0 %v745
  %767 = vmatprep.subr.mxu0 0.0
  %768 = vmatpush1.xpose.msra.mxu0 %v747
  %769 = vmatprep.subr.mxu0 0.0
  %770 = vmatpush1.xpose.msra.mxu0 0.0
  %771 = vmatprep.subr.mxu0 0.0
  %772 = vmatpush1.xpose.msra.mxu0 0.0
  %773 = vmatprep.subr.mxu0 0.0
  %774 = vmatpush1.xpose.msra.mxu0 0.0
  %775 = vmatprep.subr.mxu0 0.0
  %776 = vmatpush1.xpose.msra.mxu0 0.0
  %777 = vmatprep.subr.mxu0 0.0
  %778 = vmatpush1.xpose.msra.mxu0 0.0
  %779 = vmatprep.subr.mxu0 0.0
  %780 = vmatpush1.xpose.msra.mxu0 0.0
  %781 = vmatprep.subr.mxu0 0.0
  %782 = vmatpush1.xpose.msra.mxu0 0.0
  %783 = vmatprep.subr.mxu0 0.0
  %784 = vmatpush1.xpose.msra.mxu0 0.0
  %785 = vmatprep.subr.mxu0 0.0
  %786 = vmatpush1.xpose.msra.mxu0 0.0
  %787 = vmatprep.subr.mxu0 0.0
  %788 = vmatpush1.xpose.msra.mxu0 0.0
  %789 = vmatprep.subr.mxu0 0.0
  %790 = vmatpush1.xpose.msra.mxu0 0.0
  %791 = vmatprep.subr.mxu0 0.0
  %792 = vmatpush1.xpose.msra.mxu0 0.0
  %793 = vmatprep.subr.mxu0 0.0
  %794 = vmatpush1.xpose.msra.mxu0 0.0
  %795 = vmatprep.subr.mxu0 0.0
  %796 = vmatpush1.xpose.msra.mxu0 0.0
  %797 = vmatprep.subr.mxu0 0.0
  %798 = vmatpush1.xpose.msra.mxu0 0.0
  %799 = vmatprep.subr.mxu0 0.0
  %800 = vmatpush1.xpose.msra.mxu0 0.0
  %801 = vmatprep.subr.mxu0 0.0
  %802 = vmatpush1.xpose.msra.mxu0 0.0
  %803 = vmatprep.subr.mxu0 0.0
  %804 = vmatpush1.xpose.msra.mxu0 0.0
  %805 = vmatprep.subr.mxu0 0.0
  %806 = vmatpush1.xpose.msra.mxu0 0.0
  %807 = vmatprep.subr.mxu0 0.0
  %808 = vmatpush1.xpose.msra.mxu0 0.0
  %809 = vmatprep.subr.mxu0 0.0
  %810 = vmatpush1.xpose.msra.mxu0 0.0
  %811 = vmatprep.subr.mxu0 0.0
  %812 = vmatpush1.xpose.msra.mxu0 0.0
  %813 = vmatprep.mubr.f32.mxu0 0.0
  %814 = vmatmul.mubr.f32.gmra.mrb[0].mxu0 %v709
  %v815 = vpop.f32.mrb[0].mxu0
  %v816 = vadd.f32 %v187, %v815
  %v817 = vpop.f32.mrb[0].mxu0
  %818 = vmatprep.mubr.f32.mxu0 0.0
  %819 = vmatmul.mubr.f32.gmra.mrb[0].mxu0 %v711
  %v820 = vpop.f32.mrb[0].mxu0
  %v821 = vadd.f32 %v188, %v820
  %v822 = vpop.f32.mrb[0].mxu0
  %823 = vmatprep.mubr.f32.mxu0 0.0
  %824 = vmatmul.mubr.f32.gmra.mrb[0].mxu0 %v713
  %v825 = vpop.f32.mrb[0].mxu0
  %v826 = vadd.f32 %v189, %v825
  %v827 = vpop.f32.mrb[0].mxu0
  %828 = vmatprep.mubr.f32.mxu0 0.0
  %829 = vmatmul.mubr.f32.gmra.mrb[0].mxu0 %v715
  %v830 = vpop.f32.mrb[0].mxu0
  %v831 = vadd.f32 %v190, %v830
  %v832 = vpop.f32.mrb[0].mxu0
  %833 = vmatprep.mubr.f32.mxu0 0.0
  %834 = vmatmul.mubr.f32.gmra.mrb[0].mxu0 %v717
  %v835 = vpop.f32.mrb[0].mxu0
  %v836 = vadd.f32 %v191, %v835
  %v837 = vpop.f32.mrb[0].mxu0
  %838 = vmatprep.mubr.f32.mxu0 0.0
  %839 = vmatmul.mubr.f32.gmra.mrb[0].mxu0 %v719
  %v840 = vpop.f32.mrb[0].mxu0
  %v841 = vadd.f32 %v192, %v840
  %v842 = vpop.f32.mrb[0].mxu0
  %843 = vmatprep.mubr.f32.mxu0 0.0
  %844 = vmatmul.mubr.f32.gmra.mrb[0].mxu0 %v721
  %v845 = vpop.f32.mrb[0].mxu0
  %v846 = vadd.f32 %v193, %v845
  %v847 = vpop.f32.mrb[0].mxu0
  %848 = vmatprep.mubr.f32.mxu0 0.0
  %849 = vmatmul.mubr.f32.gmra.mrb[0].mxu0 %v723
  %v850 = vpop.f32.mrb[0].mxu0
  %v851 = vadd.f32 %v194, %v850
  %v852 = vpop.f32.mrb[0].mxu0
  %853 = vmatprep.mubr.f32.mxu0 0.0
  %854 = vmatmul.mubr.f32.gmra.mrb[0].mxu0 %v725
  %v855 = vpop.f32.mrb[0].mxu0
  %v856 = vadd.f32 %v195, %v855
  %v857 = vpop.f32.mrb[0].mxu0
  %858 = vmatprep.mubr.f32.mxu0 0.0
  %859 = vmatmul.mubr.f32.gmra.mrb[0].mxu0 %v727
  %v860 = vpop.f32.mrb[0].mxu0
  %v861 = vadd.f32 %v196, %v860
  %v862 = vpop.f32.mrb[0].mxu0
  %863 = vdwg.mxu0
  %v864 = vsel %vm383, %v816, -inf
  %865 = vmax.xlane.f32.xlu0 %v864
  %v866 = vpop.xlane.xlu0 %865
  %v867 = vsel %vm383, %v821, -inf
  %868 = vmax.xlane.f32.xlu0 %v867
  %v869 = vpop.xlane.xlu0 %868
  %v870 = vsel %vm383, %v826, -inf
  %871 = vmax.xlane.f32.xlu0 %v870
  %v872 = vpop.xlane.xlu0 %871
  %v873 = vsel %vm383, %v831, -inf
  %874 = vmax.xlane.f32.xlu0 %v873
  %v875 = vpop.xlane.xlu0 %874
  %v876 = vsel %vm383, %v836, -inf
  %877 = vmax.xlane.f32.xlu0 %v876
  %v878 = vpop.xlane.xlu0 %877
  %v879 = vsel %vm383, %v841, -inf
  %880 = vmax.xlane.f32.xlu0 %v879
  %v881 = vpop.xlane.xlu0 %880
  %v882 = vsel %vm383, %v846, -inf
  %883 = vmax.xlane.f32.xlu0 %v882
  %v884 = vpop.xlane.xlu0 %883
  %v885 = vsel %vm383, %v851, -inf
  %886 = vmax.xlane.f32.xlu0 %v885
  %v887 = vpop.xlane.xlu0 %886
  %v888 = vsel %vm383, %v856, -inf
  %889 = vmax.xlane.f32.xlu0 %v888
  %v890 = vpop.xlane.xlu0 %889
  %v891 = vsel %vm383, %v861, -inf
  %892 = vmax.xlane.f32.xlu0 %v891
  %v893 = vpop.xlane.xlu0 %892
  %v894 = vsub.f32 %v816, %v866
  %v895 = vsub.f32 %v821, %v869
  %v896 = vsub.f32 %v826, %v872
  %v897 = vsub.f32 %v831, %v875
  %v898 = vsub.f32 %v836, %v878
  %v899 = vsub.f32 %v841, %v881
  %v900 = vsub.f32 %v846, %v884
  %v901 = vsub.f32 %v851, %v887
  %v902 = vsub.f32 %v856, %v890
  %v903 = vsub.f32 %v861, %v893
  %v904 = vmul.f32 %v894, 1.442695
  %v905 = vpow.pop %v904
  %v906 = vmul.f32 %v895, 1.442695
  %v907 = vpow.pop %v906
  %v908 = vmul.f32 %v896, 1.442695
  %v909 = vpow.pop %v908
  %v910 = vmul.f32 %v897, 1.442695
  %v911 = vpow.pop %v910
  %v912 = vmul.f32 %v898, 1.442695
  %v913 = vpow.pop %v912
  %v914 = vmul.f32 %v899, 1.442695
  %v915 = vpow.pop %v914
  %v916 = vmul.f32 %v900, 1.442695
  %v917 = vpow.pop %v916
  %v918 = vmul.f32 %v901, 1.442695
  %v919 = vpow.pop %v918
  %v920 = vmul.f32 %v902, 1.442695
  %v921 = vpow.pop %v920
  %v922 = vmul.f32 %v903, 1.442695
  %v923 = vpow.pop %v922
  %v924 = vsel %vm383, %v905, 0.0
  %925 = vadd.xlane.f32.xlu0 %v924
  %v926 = vpop.xlane.xlu0 %925
  %v927 = vsel %vm383, %v907, 0.0
  %928 = vadd.xlane.f32.xlu0 %v927
  %v929 = vpop.xlane.xlu0 %928
  %v930 = vsel %vm383, %v909, 0.0
  %931 = vadd.xlane.f32.xlu0 %v930
  %v932 = vpop.xlane.xlu0 %931
  %v933 = vsel %vm383, %v911, 0.0
  %934 = vadd.xlane.f32.xlu0 %v933
  %v935 = vpop.xlane.xlu0 %934
  %v936 = vsel %vm383, %v913, 0.0
  %937 = vadd.xlane.f32.xlu0 %v936
  %v938 = vpop.xlane.xlu0 %937
  %v939 = vsel %vm383, %v915, 0.0
  %940 = vadd.xlane.f32.xlu0 %v939
  %v941 = vpop.xlane.xlu0 %940
  %v942 = vsel %vm383, %v917, 0.0
  %943 = vadd.xlane.f32.xlu0 %v942
  %v944 = vpop.xlane.xlu0 %943
  %v945 = vsel %vm383, %v919, 0.0
  %946 = vadd.xlane.f32.xlu0 %v945
  %v947 = vpop.xlane.xlu0 %946
  %v948 = vsel %vm383, %v921, 0.0
  %949 = vadd.xlane.f32.xlu0 %v948
  %v950 = vpop.xlane.xlu0 %949
  %v951 = vsel %vm383, %v923, 0.0
  %952 = vadd.xlane.f32.xlu0 %v951
  %v953 = vpop.xlane.xlu0 %952
  %v954 = vrcp.pop %v926
  %v955 = vrcp.pop %v929
  %v956 = vrcp.pop %v932
  %v957 = vrcp.pop %v935
  %v958 = vrcp.pop %v938
  %v959 = vrcp.pop %v941
  %v960 = vrcp.pop %v944
  %v961 = vrcp.pop %v947
  %v962 = vrcp.pop %v950
  %v963 = vrcp.pop %v953
  %v964 = vmul.f32 %v905, %v954
  %v965 = vmul.f32 %v907, %v955
  %v966 = vmul.f32 %v909, %v956
  %v967 = vmul.f32 %v911, %v957
  %v968 = vmul.f32 %v913, %v958
  %v969 = vmul.f32 %v915, %v959
  %v970 = vmul.f32 %v917, %v960
  %v971 = vmul.f32 %v919, %v961
  %v972 = vmul.f32 %v921, %v962
  %v973 = vmul.f32 %v923, %v963
  %974 = vrot.lane.b32.xlu0 %v139, 56
  %v975 = vpop.permute.xlu0 %974
  %976 = vrot.lane.b32.xlu0 %v144, 56
  %v977 = vpop.permute.xlu0 %976
  %978 = vrot.lane.b32.xlu0 %v149, 56
  %v979 = vpop.permute.xlu0 %978
  %980 = vrot.lane.b32.xlu0 %v154, 56
  %v981 = vpop.permute.xlu0 %980
  %982 = vrot.lane.b32.xlu0 %v159, 56
  %v983 = vpop.permute.xlu0 %982
  %984 = vrot.lane.b32.xlu0 %v164, 56
  %v985 = vpop.permute.xlu0 %984
  %986 = vrot.lane.b32.xlu0 %v169, 56
  %v987 = vpop.permute.xlu0 %986
  %988 = vrot.lane.b32.xlu0 %v174, 56
  %v989 = vpop.permute.xlu0 %988
  %990 = vrot.lane.b32.xlu0 %v179, 56
  %v991 = vpop.permute.xlu0 %990
  %992 = vrot.lane.b32.xlu0 %v184, 56
  %v993 = vpop.permute.xlu0 %992
  %v1005 = vsel %vm383, %v964, 0
  %v1008 = vsel %vm383, %v965, 0
  %v1011 = vsel %vm383, %v966, 0
  %v1014 = vsel %vm383, %v967, 0
  %v1017 = vsel %vm383, %v968, 0
  %v1020 = vsel %vm383, %v969, 0
  %v1023 = vsel %vm383, %v970, 0
  %v1026 = vsel %vm383, %v971, 0
  %v1029 = vsel %vm383, %v972, 0
  %v1032 = vsel %vm383, %v973, 0
  %1034 = vmatprep.subr.mxu0 0.0
  %1035 = vmatpush1.msra.mxu0 %v975
  %1036 = vmatprep.subr.mxu0 0.0
  %1037 = vmatpush1.msra.mxu0 %v977
  %1038 = vmatprep.subr.mxu0 0.0
  %1039 = vmatpush1.msra.mxu0 %v979
  %1040 = vmatprep.subr.mxu0 0.0
  %1041 = vmatpush1.msra.mxu0 %v981
  %1042 = vmatprep.subr.mxu0 0.0
  %1043 = vmatpush1.msra.mxu0 %v983
  %1044 = vmatprep.subr.mxu0 0.0
  %1045 = vmatpush1.msra.mxu0 %v985
  %1046 = vmatprep.subr.mxu0 0.0
  %1047 = vmatpush1.msra.mxu0 %v987
  %1048 = vmatprep.subr.mxu0 0.0
  %1049 = vmatpush1.msra.mxu0 %v989
  %1050 = vmatprep.subr.mxu0 0.0
  %1051 = vmatpush1.msra.mxu0 %v991
  %1052 = vmatprep.subr.mxu0 0.0
  %1053 = vmatpush1.msra.mxu0 %v993
  %1054 = vmatprep.subr.mxu0 0.0
  %1055 = vmatpush1.msra.mxu0 0.0
  %1056 = vmatprep.subr.mxu0 0.0
  %1057 = vmatpush1.msra.mxu0 0.0
  %1058 = vmatprep.subr.mxu0 0.0
  %1059 = vmatpush1.msra.mxu0 0.0
  %1060 = vmatprep.subr.mxu0 0.0
  %1061 = vmatpush1.msra.mxu0 0.0
  %1062 = vmatprep.subr.mxu0 0.0
  %1063 = vmatpush1.msra.mxu0 0.0
  %1064 = vmatprep.subr.mxu0 0.0
  %1065 = vmatpush1.msra.mxu0 0.0
  %1066 = vmatprep.subr.mxu0 0.0
  %1067 = vmatpush1.msra.mxu0 0.0
  %1068 = vmatprep.subr.mxu0 0.0
  %1069 = vmatpush1.msra.mxu0 0.0
  %1070 = vmatprep.subr.mxu0 0.0
  %1071 = vmatpush1.msra.mxu0 0.0
  %1072 = vmatprep.subr.mxu0 0.0
  %1073 = vmatpush1.msra.mxu0 0.0
  %1074 = vmatprep.subr.mxu0 0.0
  %1075 = vmatpush1.msra.mxu0 0.0
  %1076 = vmatprep.subr.mxu0 0.0
  %1077 = vmatpush1.msra.mxu0 0.0
  %1078 = vmatprep.subr.mxu0 0.0
  %1079 = vmatpush1.msra.mxu0 0.0
  %1080 = vmatprep.subr.mxu0 0.0
  %1081 = vmatpush1.msra.mxu0 0.0
  %1082 = vmatprep.subr.mxu0 0.0
  %1083 = vmatpush1.msra.mxu0 0.0
  %1084 = vmatprep.subr.mxu0 0.0
  %1085 = vmatpush1.msra.mxu0 0.0
  %1086 = vmatprep.subr.mxu0 0.0
  %1087 = vmatpush1.msra.mxu0 0.0
  %1088 = vmatprep.subr.mxu0 0.0
  %1089 = vmatpush1.msra.mxu0 0.0
  %1090 = vmatprep.subr.mxu0 0.0
  %1091 = vmatpush1.msra.mxu0 0.0
  %1092 = vmatprep.subr.mxu0 0.0
  %1093 = vmatpush1.msra.mxu0 0.0
  %1094 = vmatprep.subr.mxu0 0.0
  %1095 = vmatpush1.msra.mxu0 0.0
  %1096 = vmatprep.subr.mxu0 0.0
  %1097 = vmatpush1.msra.mxu0 0.0
  %1098 = vmatprep.mubr.f32.mxu0 0.0
  %1099 = vmatmul.mubr.f32.gmra.mrb[0].mxu0 %v1005
  %v1100 = vpop.f32.mrb[0].mxu0
  %v1101 = vadd.f32 0.0, %v1100
  %v1102 = vpop.f32.mrb[0].mxu0
  %1103 = vmatprep.mubr.f32.mxu0 0.0
  %1104 = vmatmul.mubr.f32.gmra.mrb[0].mxu0 %v1008
  %v1105 = vpop.f32.mrb[0].mxu0
  %v1106 = vadd.f32 0.0, %v1105
  %v1107 = vpop.f32.mrb[0].mxu0
  %1108 = vmatprep.mubr.f32.mxu0 0.0
  %1109 = vmatmul.mubr.f32.gmra.mrb[0].mxu0 %v1011
  %v1110 = vpop.f32.mrb[0].mxu0
  %v1111 = vadd.f32 0.0, %v1110
  %v1112 = vpop.f32.mrb[0].mxu0
  %1113 = vmatprep.mubr.f32.mxu0 0.0
  %1114 = vmatmul.mubr.f32.gmra.mrb[0].mxu0 %v1014
  %v1115 = vpop.f32.mrb[0].mxu0
  %v1116 = vadd.f32 0.0, %v1115
  %v1117 = vpop.f32.mrb[0].mxu0
  %1118 = vmatprep.mubr.f32.mxu0 0.0
  %1119 = vmatmul.mubr.f32.gmra.mrb[0].mxu0 %v1017
  %v1120 = vpop.f32.mrb[0].mxu0
  %v1121 = vadd.f32 0.0, %v1120
  %v1122 = vpop.f32.mrb[0].mxu0
  %1123 = vmatprep.mubr.f32.mxu0 0.0
  %1124 = vmatmul.mubr.f32.gmra.mrb[0].mxu0 %v1020
  %v1125 = vpop.f32.mrb[0].mxu0
  %v1126 = vadd.f32 0.0, %v1125
  %v1127 = vpop.f32.mrb[0].mxu0
  %1128 = vmatprep.mubr.f32.mxu0 0.0
  %1129 = vmatmul.mubr.f32.gmra.mrb[0].mxu0 %v1023
  %v1130 = vpop.f32.mrb[0].mxu0
  %v1131 = vadd.f32 0.0, %v1130
  %v1132 = vpop.f32.mrb[0].mxu0
  %1133 = vmatprep.mubr.f32.mxu0 0.0
  %1134 = vmatmul.mubr.f32.gmra.mrb[0].mxu0 %v1026
  %v1135 = vpop.f32.mrb[0].mxu0
  %v1136 = vadd.f32 0.0, %v1135
  %v1137 = vpop.f32.mrb[0].mxu0
  %1138 = vmatprep.mubr.f32.mxu0 0.0
  %1139 = vmatmul.mubr.f32.gmra.mrb[0].mxu0 %v1029
  %v1140 = vpop.f32.mrb[0].mxu0
  %v1141 = vadd.f32 0.0, %v1140
  %v1142 = vpop.f32.mrb[0].mxu0
  %1143 = vmatprep.mubr.f32.mxu0 0.0
  %1144 = vmatmul.mubr.f32.gmra.mrb[0].mxu0 %v1032
  %v1145 = vpop.f32.mrb[0].mxu0
  %v1146 = vadd.f32 0.0, %v1145
  %v1147 = vpop.f32.mrb[0].mxu0
  %1148 = vdwg.mxu0
  %1149 = vrot.lane.b32.xlu0 %v139, 112
  %v1150 = vpop.permute.xlu0 %1149
  %1151 = vrot.lane.b32.xlu0 %v144, 112
  %v1152 = vpop.permute.xlu0 %1151
  %1153 = vrot.lane.b32.xlu0 %v149, 112
  %v1154 = vpop.permute.xlu0 %1153
  %1155 = vrot.lane.b32.xlu0 %v154, 112
  %v1156 = vpop.permute.xlu0 %1155
  %1157 = vrot.lane.b32.xlu0 %v159, 112
  %v1158 = vpop.permute.xlu0 %1157
  %1159 = vrot.lane.b32.xlu0 %v164, 112
  %v1160 = vpop.permute.xlu0 %1159
  %1161 = vrot.lane.b32.xlu0 %v169, 112
  %v1162 = vpop.permute.xlu0 %1161
  %1163 = vrot.lane.b32.xlu0 %v174, 112
  %v1164 = vpop.permute.xlu0 %1163
  %1165 = vrot.lane.b32.xlu0 %v179, 112
  %v1166 = vpop.permute.xlu0 %1165
  %1167 = vrot.lane.b32.xlu0 %v184, 112
  %v1168 = vpop.permute.xlu0 %1167
  %1169 = vrot.lane.b32.xlu0 %v139, 80
  %v1170 = vpop.permute.xlu0 %1169
  %1171 = vrot.lane.b32.xlu0 %v144, 80
  %v1172 = vpop.permute.xlu0 %1171
  %1173 = vrot.lane.b32.xlu0 %v149, 80
  %v1174 = vpop.permute.xlu0 %1173
  %1175 = vrot.lane.b32.xlu0 %v154, 80
  %v1176 = vpop.permute.xlu0 %1175
  %1177 = vrot.lane.b32.xlu0 %v159, 80
  %v1178 = vpop.permute.xlu0 %1177
  %1179 = vrot.lane.b32.xlu0 %v164, 80
  %v1180 = vpop.permute.xlu0 %1179
  %1181 = vrot.lane.b32.xlu0 %v169, 80
  %v1182 = vpop.permute.xlu0 %1181
  %1183 = vrot.lane.b32.xlu0 %v174, 80
  %v1184 = vpop.permute.xlu0 %1183
  %1185 = vrot.lane.b32.xlu0 %v179, 80
  %v1186 = vpop.permute.xlu0 %1185
  %1187 = vrot.lane.b32.xlu0 %v184, 80
  %v1188 = vpop.permute.xlu0 %1187
  %v1189 = vsel %vm227, %v1150, 0
  %v1191 = vsel %vm227, %v1152, 0
  %v1193 = vsel %vm227, %v1154, 0
  %v1195 = vsel %vm227, %v1156, 0
  %v1197 = vsel %vm227, %v1158, 0
  %v1199 = vsel %vm227, %v1160, 0
  %v1201 = vsel %vm227, %v1162, 0
  %v1203 = vsel %vm227, %v1164, 0
  %v1205 = vsel %vm227, %v1166, 0
  %v1207 = vsel %vm227, %v1168, 0
  %v1209 = vsel %vm227, %v1170, 0
  %v1211 = vsel %vm227, %v1172, 0
  %v1213 = vsel %vm227, %v1174, 0
  %v1215 = vsel %vm227, %v1176, 0
  %v1217 = vsel %vm227, %v1178, 0
  %v1219 = vsel %vm227, %v1180, 0
  %v1221 = vsel %vm227, %v1182, 0
  %v1223 = vsel %vm227, %v1184, 0
  %v1225 = vsel %vm227, %v1186, 0
  %v1227 = vsel %vm227, %v1188, 0
  %1229 = vmatprep.subr.mxu0 0.0
  %1230 = vmatpush1.xpose.msra.mxu0 %v1209
  %1231 = vmatprep.subr.mxu0 0.0
  %1232 = vmatpush1.xpose.msra.mxu0 %v1211
  %1233 = vmatprep.subr.mxu0 0.0
  %1234 = vmatpush1.xpose.msra.mxu0 %v1213
  %1235 = vmatprep.subr.mxu0 0.0
  %1236 = vmatpush1.xpose.msra.mxu0 %v1215
  %1237 = vmatprep.subr.mxu0 0.0
  %1238 = vmatpush1.xpose.msra.mxu0 %v1217
  %1239 = vmatprep.subr.mxu0 0.0
  %1240 = vmatpush1.xpose.msra.mxu0 %v1219
  %1241 = vmatprep.subr.mxu0 0.0
  %1242 = vmatpush1.xpose.msra.mxu0 %v1221
  %1243 = vmatprep.subr.mxu0 0.0
  %1244 = vmatpush1.xpose.msra.mxu0 %v1223
  %1245 = vmatprep.subr.mxu0 0.0
  %1246 = vmatpush1.xpose.msra.mxu0 %v1225
  %1247 = vmatprep.subr.mxu0 0.0
  %1248 = vmatpush1.xpose.msra.mxu0 %v1227
  %1249 = vmatprep.subr.mxu0 0.0
  %1250 = vmatpush1.xpose.msra.mxu0 0.0
  %1251 = vmatprep.subr.mxu0 0.0
  %1252 = vmatpush1.xpose.msra.mxu0 0.0
  %1253 = vmatprep.subr.mxu0 0.0
  %1254 = vmatpush1.xpose.msra.mxu0 0.0
  %1255 = vmatprep.subr.mxu0 0.0
  %1256 = vmatpush1.xpose.msra.mxu0 0.0
  %1257 = vmatprep.subr.mxu0 0.0
  %1258 = vmatpush1.xpose.msra.mxu0 0.0
  %1259 = vmatprep.subr.mxu0 0.0
  %1260 = vmatpush1.xpose.msra.mxu0 0.0
  %1261 = vmatprep.subr.mxu0 0.0
  %1262 = vmatpush1.xpose.msra.mxu0 0.0
  %1263 = vmatprep.subr.mxu0 0.0
  %1264 = vmatpush1.xpose.msra.mxu0 0.0
  %1265 = vmatprep.subr.mxu0 0.0
  %1266 = vmatpush1.xpose.msra.mxu0 0.0
  %1267 = vmatprep.subr.mxu0 0.0
  %1268 = vmatpush1.xpose.msra.mxu0 0.0
  %1269 = vmatprep.subr.mxu0 0.0
  %1270 = vmatpush1.xpose.msra.mxu0 0.0
  %1271 = vmatprep.subr.mxu0 0.0
  %1272 = vmatpush1.xpose.msra.mxu0 0.0
  %1273 = vmatprep.subr.mxu0 0.0
  %1274 = vmatpush1.xpose.msra.mxu0 0.0
  %1275 = vmatprep.subr.mxu0 0.0
  %1276 = vmatpush1.xpose.msra.mxu0 0.0
  %1277 = vmatprep.subr.mxu0 0.0
  %1278 = vmatpush1.xpose.msra.mxu0 0.0
  %1279 = vmatprep.subr.mxu0 0.0
  %1280 = vmatpush1.xpose.msra.mxu0 0.0
  %1281 = vmatprep.subr.mxu0 0.0
  %1282 = vmatpush1.xpose.msra.mxu0 0.0
  %1283 = vmatprep.subr.mxu0 0.0
  %1284 = vmatpush1.xpose.msra.mxu0 0.0
  %1285 = vmatprep.subr.mxu0 0.0
  %1286 = vmatpush1.xpose.msra.mxu0 0.0
  %1287 = vmatprep.subr.mxu0 0.0
  %1288 = vmatpush1.xpose.msra.mxu0 0.0
  %1289 = vmatprep.subr.mxu0 0.0
  %1290 = vmatpush1.xpose.msra.mxu0 0.0
  %1291 = vmatprep.subr.mxu0 0.0
  %1292 = vmatpush1.xpose.msra.mxu0 0.0
  %1293 = vmatprep.mubr.f32.mxu0 0.0
  %1294 = vmatmul.mubr.f32.gmra.mrb[0].mxu0 %v1189
  %v1295 = vpop.f32.mrb[0].mxu0
  %v1296 = vadd.f32 %v187, %v1295
  %v1297 = vpop.f32.mrb[0].mxu0
  %1298 = vmatprep.mubr.f32.mxu0 0.0
  %1299 = vmatmul.mubr.f32.gmra.mrb[0].mxu0 %v1191
  %v1300 = vpop.f32.mrb[0].mxu0
  %v1301 = vadd.f32 %v188, %v1300
  %v1302 = vpop.f32.mrb[0].mxu0
  %1303 = vmatprep.mubr.f32.mxu0 0.0
  %1304 = vmatmul.mubr.f32.gmra.mrb[0].mxu0 %v1193
  %v1305 = vpop.f32.mrb[0].mxu0
  %v1306 = vadd.f32 %v189, %v1305
  %v1307 = vpop.f32.mrb[0].mxu0
  %1308 = vmatprep.mubr.f32.mxu0 0.0
  %1309 = vmatmul.mubr.f32.gmra.mrb[0].mxu0 %v1195
  %v1310 = vpop.f32.mrb[0].mxu0
  %v1311 = vadd.f32 %v190, %v1310
  %v1312 = vpop.f32.mrb[0].mxu0
  %1313 = vmatprep.mubr.f32.mxu0 0.0
  %1314 = vmatmul.mubr.f32.gmra.mrb[0].mxu0 %v1197
  %v1315 = vpop.f32.mrb[0].mxu0
  %v1316 = vadd.f32 %v191, %v1315
  %v1317 = vpop.f32.mrb[0].mxu0
  %1318 = vmatprep.mubr.f32.mxu0 0.0
  %1319 = vmatmul.mubr.f32.gmra.mrb[0].mxu0 %v1199
  %v1320 = vpop.f32.mrb[0].mxu0
  %v1321 = vadd.f32 %v192, %v1320
  %v1322 = vpop.f32.mrb[0].mxu0
  %1323 = vmatprep.mubr.f32.mxu0 0.0
  %1324 = vmatmul.mubr.f32.gmra.mrb[0].mxu0 %v1201
  %v1325 = vpop.f32.mrb[0].mxu0
  %v1326 = vadd.f32 %v193, %v1325
  %v1327 = vpop.f32.mrb[0].mxu0
  %1328 = vmatprep.mubr.f32.mxu0 0.0
  %1329 = vmatmul.mubr.f32.gmra.mrb[0].mxu0 %v1203
  %v1330 = vpop.f32.mrb[0].mxu0
  %v1331 = vadd.f32 %v194, %v1330
  %v1332 = vpop.f32.mrb[0].mxu0
  %1333 = vmatprep.mubr.f32.mxu0 0.0
  %1334 = vmatmul.mubr.f32.gmra.mrb[0].mxu0 %v1205
  %v1335 = vpop.f32.mrb[0].mxu0
  %v1336 = vadd.f32 %v195, %v1335
  %v1337 = vpop.f32.mrb[0].mxu0
  %1338 = vmatprep.mubr.f32.mxu0 0.0
  %1339 = vmatmul.mubr.f32.gmra.mrb[0].mxu0 %v1207
  %v1340 = vpop.f32.mrb[0].mxu0
  %v1341 = vadd.f32 %v196, %v1340
  %v1342 = vpop.f32.mrb[0].mxu0
  %1343 = vdwg.mxu0
  %v1344 = vsel %vm383, %v1296, -inf
  %1345 = vmax.xlane.f32.xlu0 %v1344
  %v1346 = vpop.xlane.xlu0 %1345
  %v1347 = vsel %vm383, %v1301, -inf
  %1348 = vmax.xlane.f32.xlu0 %v1347
  %v1349 = vpop.xlane.xlu0 %1348
  %v1350 = vsel %vm383, %v1306, -inf
  %1351 = vmax.xlane.f32.xlu0 %v1350
  %v1352 = vpop.xlane.xlu0 %1351
  %v1353 = vsel %vm383, %v1311, -inf
  %1354 = vmax.xlane.f32.xlu0 %v1353
  %v1355 = vpop.xlane.xlu0 %1354
  %v1356 = vsel %vm383, %v1316, -inf
  %1357 = vmax.xlane.f32.xlu0 %v1356
  %v1358 = vpop.xlane.xlu0 %1357
  %v1359 = vsel %vm383, %v1321, -inf
  %1360 = vmax.xlane.f32.xlu0 %v1359
  %v1361 = vpop.xlane.xlu0 %1360
  %v1362 = vsel %vm383, %v1326, -inf
  %1363 = vmax.xlane.f32.xlu0 %v1362
  %v1364 = vpop.xlane.xlu0 %1363
  %v1365 = vsel %vm383, %v1331, -inf
  %1366 = vmax.xlane.f32.xlu0 %v1365
  %v1367 = vpop.xlane.xlu0 %1366
  %v1368 = vsel %vm383, %v1336, -inf
  %1369 = vmax.xlane.f32.xlu0 %v1368
  %v1370 = vpop.xlane.xlu0 %1369
  %v1371 = vsel %vm383, %v1341, -inf
  %1372 = vmax.xlane.f32.xlu0 %v1371
  %v1373 = vpop.xlane.xlu0 %1372
  %v1374 = vsub.f32 %v1296, %v1346
  %v1375 = vsub.f32 %v1301, %v1349
  %v1376 = vsub.f32 %v1306, %v1352
  %v1377 = vsub.f32 %v1311, %v1355
  %v1378 = vsub.f32 %v1316, %v1358
  %v1379 = vsub.f32 %v1321, %v1361
  %v1380 = vsub.f32 %v1326, %v1364
  %v1381 = vsub.f32 %v1331, %v1367
  %v1382 = vsub.f32 %v1336, %v1370
  %v1383 = vsub.f32 %v1341, %v1373
  %v1384 = vmul.f32 %v1374, 1.442695
  %v1385 = vpow.pop %v1384
  %v1386 = vmul.f32 %v1375, 1.442695
  %v1387 = vpow.pop %v1386
  %v1388 = vmul.f32 %v1376, 1.442695
  %v1389 = vpow.pop %v1388
  %v1390 = vmul.f32 %v1377, 1.442695
  %v1391 = vpow.pop %v1390
  %v1392 = vmul.f32 %v1378, 1.442695
  %v1393 = vpow.pop %v1392
  %v1394 = vmul.f32 %v1379, 1.442695
  %v1395 = vpow.pop %v1394
  %v1396 = vmul.f32 %v1380, 1.442695
  %v1397 = vpow.pop %v1396
  %v1398 = vmul.f32 %v1381, 1.442695
  %v1399 = vpow.pop %v1398
  %v1400 = vmul.f32 %v1382, 1.442695
  %v1401 = vpow.pop %v1400
  %v1402 = vmul.f32 %v1383, 1.442695
  %v1403 = vpow.pop %v1402
  %v1404 = vsel %vm383, %v1385, 0.0
  %1405 = vadd.xlane.f32.xlu0 %v1404
  %v1406 = vpop.xlane.xlu0 %1405
  %v1407 = vsel %vm383, %v1387, 0.0
  %1408 = vadd.xlane.f32.xlu0 %v1407
  %v1409 = vpop.xlane.xlu0 %1408
  %v1410 = vsel %vm383, %v1389, 0.0
  %1411 = vadd.xlane.f32.xlu0 %v1410
  %v1412 = vpop.xlane.xlu0 %1411
  %v1413 = vsel %vm383, %v1391, 0.0
  %1414 = vadd.xlane.f32.xlu0 %v1413
  %v1415 = vpop.xlane.xlu0 %1414
  %v1416 = vsel %vm383, %v1393, 0.0
  %1417 = vadd.xlane.f32.xlu0 %v1416
  %v1418 = vpop.xlane.xlu0 %1417
  %v1419 = vsel %vm383, %v1395, 0.0
  %1420 = vadd.xlane.f32.xlu0 %v1419
  %v1421 = vpop.xlane.xlu0 %1420
  %v1422 = vsel %vm383, %v1397, 0.0
  %1423 = vadd.xlane.f32.xlu0 %v1422
  %v1424 = vpop.xlane.xlu0 %1423
  %v1425 = vsel %vm383, %v1399, 0.0
  %1426 = vadd.xlane.f32.xlu0 %v1425
  %v1427 = vpop.xlane.xlu0 %1426
  %v1428 = vsel %vm383, %v1401, 0.0
  %1429 = vadd.xlane.f32.xlu0 %v1428
  %v1430 = vpop.xlane.xlu0 %1429
  %v1431 = vsel %vm383, %v1403, 0.0
  %1432 = vadd.xlane.f32.xlu0 %v1431
  %v1433 = vpop.xlane.xlu0 %1432
  %v1434 = vrcp.pop %v1406
  %v1435 = vrcp.pop %v1409
  %v1436 = vrcp.pop %v1412
  %v1437 = vrcp.pop %v1415
  %v1438 = vrcp.pop %v1418
  %v1439 = vrcp.pop %v1421
  %v1440 = vrcp.pop %v1424
  %v1441 = vrcp.pop %v1427
  %v1442 = vrcp.pop %v1430
  %v1443 = vrcp.pop %v1433
  %v1444 = vmul.f32 %v1385, %v1434
  %v1445 = vmul.f32 %v1387, %v1435
  %v1446 = vmul.f32 %v1389, %v1436
  %v1447 = vmul.f32 %v1391, %v1437
  %v1448 = vmul.f32 %v1393, %v1438
  %v1449 = vmul.f32 %v1395, %v1439
  %v1450 = vmul.f32 %v1397, %v1440
  %v1451 = vmul.f32 %v1399, %v1441
  %v1452 = vmul.f32 %v1401, %v1442
  %v1453 = vmul.f32 %v1403, %v1443
  %1454 = vrot.lane.b32.xlu0 %v139, 48
  %v1455 = vpop.permute.xlu0 %1454
  %1456 = vrot.lane.b32.xlu0 %v144, 48
  %v1457 = vpop.permute.xlu0 %1456
  %1458 = vrot.lane.b32.xlu0 %v149, 48
  %v1459 = vpop.permute.xlu0 %1458
  %1460 = vrot.lane.b32.xlu0 %v154, 48
  %v1461 = vpop.permute.xlu0 %1460
  %1462 = vrot.lane.b32.xlu0 %v159, 48
  %v1463 = vpop.permute.xlu0 %1462
  %1464 = vrot.lane.b32.xlu0 %v164, 48
  %v1465 = vpop.permute.xlu0 %1464
  %1466 = vrot.lane.b32.xlu0 %v169, 48
  %v1467 = vpop.permute.xlu0 %1466
  %1468 = vrot.lane.b32.xlu0 %v174, 48
  %v1469 = vpop.permute.xlu0 %1468
  %1470 = vrot.lane.b32.xlu0 %v179, 48
  %v1471 = vpop.permute.xlu0 %1470
  %1472 = vrot.lane.b32.xlu0 %v184, 48
  %v1473 = vpop.permute.xlu0 %1472
  %v1485 = vsel %vm383, %v1444, 0
  %v1488 = vsel %vm383, %v1445, 0
  %v1491 = vsel %vm383, %v1446, 0
  %v1494 = vsel %vm383, %v1447, 0
  %v1497 = vsel %vm383, %v1448, 0
  %v1500 = vsel %vm383, %v1449, 0
  %v1503 = vsel %vm383, %v1450, 0
  %v1506 = vsel %vm383, %v1451, 0
  %v1509 = vsel %vm383, %v1452, 0
  %v1512 = vsel %vm383, %v1453, 0
  %1514 = vmatprep.subr.mxu0 0.0
  %1515 = vmatpush1.msra.mxu0 %v1455
  %1516 = vmatprep.subr.mxu0 0.0
  %1517 = vmatpush1.msra.mxu0 %v1457
  %1518 = vmatprep.subr.mxu0 0.0
  %1519 = vmatpush1.msra.mxu0 %v1459
  %1520 = vmatprep.subr.mxu0 0.0
  %1521 = vmatpush1.msra.mxu0 %v1461
  %1522 = vmatprep.subr.mxu0 0.0
  %1523 = vmatpush1.msra.mxu0 %v1463
  %1524 = vmatprep.subr.mxu0 0.0
  %1525 = vmatpush1.msra.mxu0 %v1465
  %1526 = vmatprep.subr.mxu0 0.0
  %1527 = vmatpush1.msra.mxu0 %v1467
  %1528 = vmatprep.subr.mxu0 0.0
  %1529 = vmatpush1.msra.mxu0 %v1469
  %1530 = vmatprep.subr.mxu0 0.0
  %1531 = vmatpush1.msra.mxu0 %v1471
  %1532 = vmatprep.subr.mxu0 0.0
  %1533 = vmatpush1.msra.mxu0 %v1473
  %1534 = vmatprep.subr.mxu0 0.0
  %1535 = vmatpush1.msra.mxu0 0.0
  %1536 = vmatprep.subr.mxu0 0.0
  %1537 = vmatpush1.msra.mxu0 0.0
  %1538 = vmatprep.subr.mxu0 0.0
  %1539 = vmatpush1.msra.mxu0 0.0
  %1540 = vmatprep.subr.mxu0 0.0
  %1541 = vmatpush1.msra.mxu0 0.0
  %1542 = vmatprep.subr.mxu0 0.0
  %1543 = vmatpush1.msra.mxu0 0.0
  %1544 = vmatprep.subr.mxu0 0.0
  %1545 = vmatpush1.msra.mxu0 0.0
  %1546 = vmatprep.subr.mxu0 0.0
  %1547 = vmatpush1.msra.mxu0 0.0
  %1548 = vmatprep.subr.mxu0 0.0
  %1549 = vmatpush1.msra.mxu0 0.0
  %1550 = vmatprep.subr.mxu0 0.0
  %1551 = vmatpush1.msra.mxu0 0.0
  %1552 = vmatprep.subr.mxu0 0.0
  %1553 = vmatpush1.msra.mxu0 0.0
  %1554 = vmatprep.subr.mxu0 0.0
  %1555 = vmatpush1.msra.mxu0 0.0
  %1556 = vmatprep.subr.mxu0 0.0
  %1557 = vmatpush1.msra.mxu0 0.0
  %1558 = vmatprep.subr.mxu0 0.0
  %1559 = vmatpush1.msra.mxu0 0.0
  %1560 = vmatprep.subr.mxu0 0.0
  %1561 = vmatpush1.msra.mxu0 0.0
  %1562 = vmatprep.subr.mxu0 0.0
  %1563 = vmatpush1.msra.mxu0 0.0
  %1564 = vmatprep.subr.mxu0 0.0
  %1565 = vmatpush1.msra.mxu0 0.0
  %1566 = vmatprep.subr.mxu0 0.0
  %1567 = vmatpush1.msra.mxu0 0.0
  %1568 = vmatprep.subr.mxu0 0.0
  %1569 = vmatpush1.msra.mxu0 0.0
  %1570 = vmatprep.subr.mxu0 0.0
  %1571 = vmatpush1.msra.mxu0 0.0
  %1572 = vmatprep.subr.mxu0 0.0
  %1573 = vmatpush1.msra.mxu0 0.0
  %1574 = vmatprep.subr.mxu0 0.0
  %1575 = vmatpush1.msra.mxu0 0.0
  %1576 = vmatprep.subr.mxu0 0.0
  %1577 = vmatpush1.msra.mxu0 0.0
  %1578 = vmatprep.mubr.f32.mxu0 0.0
  %1579 = vmatmul.mubr.f32.gmra.mrb[0].mxu0 %v1485
  %v1580 = vpop.f32.mrb[0].mxu0
  %v1581 = vadd.f32 0.0, %v1580
  %v1582 = vpop.f32.mrb[0].mxu0
  %1583 = vmatprep.mubr.f32.mxu0 0.0
  %1584 = vmatmul.mubr.f32.gmra.mrb[0].mxu0 %v1488
  %v1585 = vpop.f32.mrb[0].mxu0
  %v1586 = vadd.f32 0.0, %v1585
  %v1587 = vpop.f32.mrb[0].mxu0
  %1588 = vmatprep.mubr.f32.mxu0 0.0
  %1589 = vmatmul.mubr.f32.gmra.mrb[0].mxu0 %v1491
  %v1590 = vpop.f32.mrb[0].mxu0
  %v1591 = vadd.f32 0.0, %v1590
  %v1592 = vpop.f32.mrb[0].mxu0
  %1593 = vmatprep.mubr.f32.mxu0 0.0
  %1594 = vmatmul.mubr.f32.gmra.mrb[0].mxu0 %v1494
  %v1595 = vpop.f32.mrb[0].mxu0
  %v1596 = vadd.f32 0.0, %v1595
  %v1597 = vpop.f32.mrb[0].mxu0
  %1598 = vmatprep.mubr.f32.mxu0 0.0
  %1599 = vmatmul.mubr.f32.gmra.mrb[0].mxu0 %v1497
  %v1600 = vpop.f32.mrb[0].mxu0
  %v1601 = vadd.f32 0.0, %v1600
  %v1602 = vpop.f32.mrb[0].mxu0
  %1603 = vmatprep.mubr.f32.mxu0 0.0
  %1604 = vmatmul.mubr.f32.gmra.mrb[0].mxu0 %v1500
  %v1605 = vpop.f32.mrb[0].mxu0
  %v1606 = vadd.f32 0.0, %v1605
  %v1607 = vpop.f32.mrb[0].mxu0
  %1608 = vmatprep.mubr.f32.mxu0 0.0
  %1609 = vmatmul.mubr.f32.gmra.mrb[0].mxu0 %v1503
  %v1610 = vpop.f32.mrb[0].mxu0
  %v1611 = vadd.f32 0.0, %v1610
  %v1612 = vpop.f32.mrb[0].mxu0
  %1613 = vmatprep.mubr.f32.mxu0 0.0
  %1614 = vmatmul.mubr.f32.gmra.mrb[0].mxu0 %v1506
  %v1615 = vpop.f32.mrb[0].mxu0
  %v1616 = vadd.f32 0.0, %v1615
  %v1617 = vpop.f32.mrb[0].mxu0
  %1618 = vmatprep.mubr.f32.mxu0 0.0
  %1619 = vmatmul.mubr.f32.gmra.mrb[0].mxu0 %v1509
  %v1620 = vpop.f32.mrb[0].mxu0
  %v1621 = vadd.f32 0.0, %v1620
  %v1622 = vpop.f32.mrb[0].mxu0
  %1623 = vmatprep.mubr.f32.mxu0 0.0
  %1624 = vmatmul.mubr.f32.gmra.mrb[0].mxu0 %v1512
  %v1625 = vpop.f32.mrb[0].mxu0
  %v1626 = vadd.f32 0.0, %v1625
  %v1627 = vpop.f32.mrb[0].mxu0
  %1628 = vdwg.mxu0
  %1629 = vrot.lane.b32.xlu0 %v139, 104
  %v1630 = vpop.permute.xlu0 %1629
  %1631 = vrot.lane.b32.xlu0 %v144, 104
  %v1632 = vpop.permute.xlu0 %1631
  %1633 = vrot.lane.b32.xlu0 %v149, 104
  %v1634 = vpop.permute.xlu0 %1633
  %1635 = vrot.lane.b32.xlu0 %v154, 104
  %v1636 = vpop.permute.xlu0 %1635
  %1637 = vrot.lane.b32.xlu0 %v159, 104
  %v1638 = vpop.permute.xlu0 %1637
  %1639 = vrot.lane.b32.xlu0 %v164, 104
  %v1640 = vpop.permute.xlu0 %1639
  %1641 = vrot.lane.b32.xlu0 %v169, 104
  %v1642 = vpop.permute.xlu0 %1641
  %1643 = vrot.lane.b32.xlu0 %v174, 104
  %v1644 = vpop.permute.xlu0 %1643
  %1645 = vrot.lane.b32.xlu0 %v179, 104
  %v1646 = vpop.permute.xlu0 %1645
  %1647 = vrot.lane.b32.xlu0 %v184, 104
  %v1648 = vpop.permute.xlu0 %1647
  %1649 = vrot.lane.b32.xlu0 %v139, 72
  %v1650 = vpop.permute.xlu0 %1649
  %1651 = vrot.lane.b32.xlu0 %v144, 72
  %v1652 = vpop.permute.xlu0 %1651
  %1653 = vrot.lane.b32.xlu0 %v149, 72
  %v1654 = vpop.permute.xlu0 %1653
  %1655 = vrot.lane.b32.xlu0 %v154, 72
  %v1656 = vpop.permute.xlu0 %1655
  %1657 = vrot.lane.b32.xlu0 %v159, 72
  %v1658 = vpop.permute.xlu0 %1657
  %1659 = vrot.lane.b32.xlu0 %v164, 72
  %v1660 = vpop.permute.xlu0 %1659
  %1661 = vrot.lane.b32.xlu0 %v169, 72
  %v1662 = vpop.permute.xlu0 %1661
  %1663 = vrot.lane.b32.xlu0 %v174, 72
  %v1664 = vpop.permute.xlu0 %1663
  %1665 = vrot.lane.b32.xlu0 %v179, 72
  %v1666 = vpop.permute.xlu0 %1665
  %1667 = vrot.lane.b32.xlu0 %v184, 72
  %v1668 = vpop.permute.xlu0 %1667
  %v1669 = vsel %vm227, %v1630, 0
  %v1671 = vsel %vm227, %v1632, 0
  %v1673 = vsel %vm227, %v1634, 0
  %v1675 = vsel %vm227, %v1636, 0
  %v1677 = vsel %vm227, %v1638, 0
  %v1679 = vsel %vm227, %v1640, 0
  %v1681 = vsel %vm227, %v1642, 0
  %v1683 = vsel %vm227, %v1644, 0
  %v1685 = vsel %vm227, %v1646, 0
  %v1687 = vsel %vm227, %v1648, 0
  %v1689 = vsel %vm227, %v1650, 0
  %v1691 = vsel %vm227, %v1652, 0
  %v1693 = vsel %vm227, %v1654, 0
  %v1695 = vsel %vm227, %v1656, 0
  %v1697 = vsel %vm227, %v1658, 0
  %v1699 = vsel %vm227, %v1660, 0
  %v1701 = vsel %vm227, %v1662, 0
  %v1703 = vsel %vm227, %v1664, 0
  %v1705 = vsel %vm227, %v1666, 0
  %v1707 = vsel %vm227, %v1668, 0
  %1709 = vmatprep.subr.mxu0 0.0
  %1710 = vmatpush1.xpose.msra.mxu0 %v1689
  %1711 = vmatprep.subr.mxu0 0.0
  %1712 = vmatpush1.xpose.msra.mxu0 %v1691
  %1713 = vmatprep.subr.mxu0 0.0
  %1714 = vmatpush1.xpose.msra.mxu0 %v1693
  %1715 = vmatprep.subr.mxu0 0.0
  %1716 = vmatpush1.xpose.msra.mxu0 %v1695
  %1717 = vmatprep.subr.mxu0 0.0
  %1718 = vmatpush1.xpose.msra.mxu0 %v1697
  %1719 = vmatprep.subr.mxu0 0.0
  %1720 = vmatpush1.xpose.msra.mxu0 %v1699
  %1721 = vmatprep.subr.mxu0 0.0
  %1722 = vmatpush1.xpose.msra.mxu0 %v1701
  %1723 = vmatprep.subr.mxu0 0.0
  %1724 = vmatpush1.xpose.msra.mxu0 %v1703
  %1725 = vmatprep.subr.mxu0 0.0
  %1726 = vmatpush1.xpose.msra.mxu0 %v1705
  %1727 = vmatprep.subr.mxu0 0.0
  %1728 = vmatpush1.xpose.msra.mxu0 %v1707
  %1729 = vmatprep.subr.mxu0 0.0
  %1730 = vmatpush1.xpose.msra.mxu0 0.0
  %1731 = vmatprep.subr.mxu0 0.0
  %1732 = vmatpush1.xpose.msra.mxu0 0.0
  %1733 = vmatprep.subr.mxu0 0.0
  %1734 = vmatpush1.xpose.msra.mxu0 0.0
  %1735 = vmatprep.subr.mxu0 0.0
  %1736 = vmatpush1.xpose.msra.mxu0 0.0
  %1737 = vmatprep.subr.mxu0 0.0
  %1738 = vmatpush1.xpose.msra.mxu0 0.0
  %1739 = vmatprep.subr.mxu0 0.0
  %1740 = vmatpush1.xpose.msra.mxu0 0.0
  %1741 = vmatprep.subr.mxu0 0.0
  %1742 = vmatpush1.xpose.msra.mxu0 0.0
  %1743 = vmatprep.subr.mxu0 0.0
  %1744 = vmatpush1.xpose.msra.mxu0 0.0
  %1745 = vmatprep.subr.mxu0 0.0
  %1746 = vmatpush1.xpose.msra.mxu0 0.0
  %1747 = vmatprep.subr.mxu0 0.0
  %1748 = vmatpush1.xpose.msra.mxu0 0.0
  %1749 = vmatprep.subr.mxu0 0.0
  %1750 = vmatpush1.xpose.msra.mxu0 0.0
  %1751 = vmatprep.subr.mxu0 0.0
  %1752 = vmatpush1.xpose.msra.mxu0 0.0
  %1753 = vmatprep.subr.mxu0 0.0
  %1754 = vmatpush1.xpose.msra.mxu0 0.0
  %1755 = vmatprep.subr.mxu0 0.0
  %1756 = vmatpush1.xpose.msra.mxu0 0.0
  %1757 = vmatprep.subr.mxu0 0.0
  %1758 = vmatpush1.xpose.msra.mxu0 0.0
  %1759 = vmatprep.subr.mxu0 0.0
  %1760 = vmatpush1.xpose.msra.mxu0 0.0
  %1761 = vmatprep.subr.mxu0 0.0
  %1762 = vmatpush1.xpose.msra.mxu0 0.0
  %1763 = vmatprep.subr.mxu0 0.0
  %1764 = vmatpush1.xpose.msra.mxu0 0.0
  %1765 = vmatprep.subr.mxu0 0.0
  %1766 = vmatpush1.xpose.msra.mxu0 0.0
  %1767 = vmatprep.subr.mxu0 0.0
  %1768 = vmatpush1.xpose.msra.mxu0 0.0
  %1769 = vmatprep.subr.mxu0 0.0
  %1770 = vmatpush1.xpose.msra.mxu0 0.0
  %1771 = vmatprep.subr.mxu0 0.0
  %1772 = vmatpush1.xpose.msra.mxu0 0.0
  %1773 = vmatprep.mubr.f32.mxu0 0.0
  %1774 = vmatmul.mubr.f32.gmra.mrb[0].mxu0 %v1669
  %v1775 = vpop.f32.mrb[0].mxu0
  %v1776 = vadd.f32 %v187, %v1775
  %v1777 = vpop.f32.mrb[0].mxu0
  %1778 = vmatprep.mubr.f32.mxu0 0.0
  %1779 = vmatmul.mubr.f32.gmra.mrb[0].mxu0 %v1671
  %v1780 = vpop.f32.mrb[0].mxu0
  %v1781 = vadd.f32 %v188, %v1780
  %v1782 = vpop.f32.mrb[0].mxu0
  %1783 = vmatprep.mubr.f32.mxu0 0.0
  %1784 = vmatmul.mubr.f32.gmra.mrb[0].mxu0 %v1673
  %v1785 = vpop.f32.mrb[0].mxu0
  %v1786 = vadd.f32 %v189, %v1785
  %v1787 = vpop.f32.mrb[0].mxu0
  %1788 = vmatprep.mubr.f32.mxu0 0.0
  %1789 = vmatmul.mubr.f32.gmra.mrb[0].mxu0 %v1675
  %v1790 = vpop.f32.mrb[0].mxu0
  %v1791 = vadd.f32 %v190, %v1790
  %v1792 = vpop.f32.mrb[0].mxu0
  %1793 = vmatprep.mubr.f32.mxu0 0.0
  %1794 = vmatmul.mubr.f32.gmra.mrb[0].mxu0 %v1677
  %v1795 = vpop.f32.mrb[0].mxu0
  %v1796 = vadd.f32 %v191, %v1795
  %v1797 = vpop.f32.mrb[0].mxu0
  %1798 = vmatprep.mubr.f32.mxu0 0.0
  %1799 = vmatmul.mubr.f32.gmra.mrb[0].mxu0 %v1679
  %v1800 = vpop.f32.mrb[0].mxu0
  %v1801 = vadd.f32 %v192, %v1800
  %v1802 = vpop.f32.mrb[0].mxu0
  %1803 = vmatprep.mubr.f32.mxu0 0.0
  %1804 = vmatmul.mubr.f32.gmra.mrb[0].mxu0 %v1681
  %v1805 = vpop.f32.mrb[0].mxu0
  %v1806 = vadd.f32 %v193, %v1805
  %v1807 = vpop.f32.mrb[0].mxu0
  %1808 = vmatprep.mubr.f32.mxu0 0.0
  %1809 = vmatmul.mubr.f32.gmra.mrb[0].mxu0 %v1683
  %v1810 = vpop.f32.mrb[0].mxu0
  %v1811 = vadd.f32 %v194, %v1810
  %v1812 = vpop.f32.mrb[0].mxu0
  %1813 = vmatprep.mubr.f32.mxu0 0.0
  %1814 = vmatmul.mubr.f32.gmra.mrb[0].mxu0 %v1685
  %v1815 = vpop.f32.mrb[0].mxu0
  %v1816 = vadd.f32 %v195, %v1815
  %v1817 = vpop.f32.mrb[0].mxu0
  %1818 = vmatprep.mubr.f32.mxu0 0.0
  %1819 = vmatmul.mubr.f32.gmra.mrb[0].mxu0 %v1687
  %v1820 = vpop.f32.mrb[0].mxu0
  %v1821 = vadd.f32 %v196, %v1820
  %v1822 = vpop.f32.mrb[0].mxu0
  %1823 = vdwg.mxu0
  %v1824 = vsel %vm383, %v1776, -inf
  %1825 = vmax.xlane.f32.xlu0 %v1824
  %v1826 = vpop.xlane.xlu0 %1825
  %v1827 = vsel %vm383, %v1781, -inf
  %1828 = vmax.xlane.f32.xlu0 %v1827
  %v1829 = vpop.xlane.xlu0 %1828
  %v1830 = vsel %vm383, %v1786, -inf
  %1831 = vmax.xlane.f32.xlu0 %v1830
  %v1832 = vpop.xlane.xlu0 %1831
  %v1833 = vsel %vm383, %v1791, -inf
  %1834 = vmax.xlane.f32.xlu0 %v1833
  %v1835 = vpop.xlane.xlu0 %1834
  %v1836 = vsel %vm383, %v1796, -inf
  %1837 = vmax.xlane.f32.xlu0 %v1836
  %v1838 = vpop.xlane.xlu0 %1837
  %v1839 = vsel %vm383, %v1801, -inf
  %1840 = vmax.xlane.f32.xlu0 %v1839
  %v1841 = vpop.xlane.xlu0 %1840
  %v1842 = vsel %vm383, %v1806, -inf
  %1843 = vmax.xlane.f32.xlu0 %v1842
  %v1844 = vpop.xlane.xlu0 %1843
  %v1845 = vsel %vm383, %v1811, -inf
  %1846 = vmax.xlane.f32.xlu0 %v1845
  %v1847 = vpop.xlane.xlu0 %1846
  %v1848 = vsel %vm383, %v1816, -inf
  %1849 = vmax.xlane.f32.xlu0 %v1848
  %v1850 = vpop.xlane.xlu0 %1849
  %v1851 = vsel %vm383, %v1821, -inf
  %1852 = vmax.xlane.f32.xlu0 %v1851
  %v1853 = vpop.xlane.xlu0 %1852
  %v1854 = vsub.f32 %v1776, %v1826
  %v1855 = vsub.f32 %v1781, %v1829
  %v1856 = vsub.f32 %v1786, %v1832
  %v1857 = vsub.f32 %v1791, %v1835
  %v1858 = vsub.f32 %v1796, %v1838
  %v1859 = vsub.f32 %v1801, %v1841
  %v1860 = vsub.f32 %v1806, %v1844
  %v1861 = vsub.f32 %v1811, %v1847
  %v1862 = vsub.f32 %v1816, %v1850
  %v1863 = vsub.f32 %v1821, %v1853
  %v1864 = vmul.f32 %v1854, 1.442695
  %v1865 = vpow.pop %v1864
  %v1866 = vmul.f32 %v1855, 1.442695
  %v1867 = vpow.pop %v1866
  %v1868 = vmul.f32 %v1856, 1.442695
  %v1869 = vpow.pop %v1868
  %v1870 = vmul.f32 %v1857, 1.442695
  %v1871 = vpow.pop %v1870
  %v1872 = vmul.f32 %v1858, 1.442695
  %v1873 = vpow.pop %v1872
  %v1874 = vmul.f32 %v1859, 1.442695
  %v1875 = vpow.pop %v1874
  %v1876 = vmul.f32 %v1860, 1.442695
  %v1877 = vpow.pop %v1876
  %v1878 = vmul.f32 %v1861, 1.442695
  %v1879 = vpow.pop %v1878
  %v1880 = vmul.f32 %v1862, 1.442695
  %v1881 = vpow.pop %v1880
  %v1882 = vmul.f32 %v1863, 1.442695
  %v1883 = vpow.pop %v1882
  %v1884 = vsel %vm383, %v1865, 0.0
  %1885 = vadd.xlane.f32.xlu0 %v1884
  %v1886 = vpop.xlane.xlu0 %1885
  %v1887 = vsel %vm383, %v1867, 0.0
  %1888 = vadd.xlane.f32.xlu0 %v1887
  %v1889 = vpop.xlane.xlu0 %1888
  %v1890 = vsel %vm383, %v1869, 0.0
  %1891 = vadd.xlane.f32.xlu0 %v1890
  %v1892 = vpop.xlane.xlu0 %1891
  %v1893 = vsel %vm383, %v1871, 0.0
  %1894 = vadd.xlane.f32.xlu0 %v1893
  %v1895 = vpop.xlane.xlu0 %1894
  %v1896 = vsel %vm383, %v1873, 0.0
  %1897 = vadd.xlane.f32.xlu0 %v1896
  %v1898 = vpop.xlane.xlu0 %1897
  %v1899 = vsel %vm383, %v1875, 0.0
  %1900 = vadd.xlane.f32.xlu0 %v1899
  %v1901 = vpop.xlane.xlu0 %1900
  %v1902 = vsel %vm383, %v1877, 0.0
  %1903 = vadd.xlane.f32.xlu0 %v1902
  %v1904 = vpop.xlane.xlu0 %1903
  %v1905 = vsel %vm383, %v1879, 0.0
  %1906 = vadd.xlane.f32.xlu0 %v1905
  %v1907 = vpop.xlane.xlu0 %1906
  %v1908 = vsel %vm383, %v1881, 0.0
  %1909 = vadd.xlane.f32.xlu0 %v1908
  %v1910 = vpop.xlane.xlu0 %1909
  %v1911 = vsel %vm383, %v1883, 0.0
  %1912 = vadd.xlane.f32.xlu0 %v1911
  %v1913 = vpop.xlane.xlu0 %1912
  %v1914 = vrcp.pop %v1886
  %v1915 = vrcp.pop %v1889
  %v1916 = vrcp.pop %v1892
  %v1917 = vrcp.pop %v1895
  %v1918 = vrcp.pop %v1898
  %v1919 = vrcp.pop %v1901
  %v1920 = vrcp.pop %v1904
  %v1921 = vrcp.pop %v1907
  %v1922 = vrcp.pop %v1910
  %v1923 = vrcp.pop %v1913
  %v1924 = vmul.f32 %v1865, %v1914
  %v1925 = vmul.f32 %v1867, %v1915
  %v1926 = vmul.f32 %v1869, %v1916
  %v1927 = vmul.f32 %v1871, %v1917
  %v1928 = vmul.f32 %v1873, %v1918
  %v1929 = vmul.f32 %v1875, %v1919
  %v1930 = vmul.f32 %v1877, %v1920
  %v1931 = vmul.f32 %v1879, %v1921
  %v1932 = vmul.f32 %v1881, %v1922
  %v1933 = vmul.f32 %v1883, %v1923
  %1934 = vrot.lane.b32.xlu0 %v139, 40
  %v1935 = vpop.permute.xlu0 %1934
  %1936 = vrot.lane.b32.xlu0 %v144, 40
  %v1937 = vpop.permute.xlu0 %1936
  %1938 = vrot.lane.b32.xlu0 %v149, 40
  %v1939 = vpop.permute.xlu0 %1938
  %1940 = vrot.lane.b32.xlu0 %v154, 40
  %v1941 = vpop.permute.xlu0 %1940
  %1942 = vrot.lane.b32.xlu0 %v159, 40
  %v1943 = vpop.permute.xlu0 %1942
  %1944 = vrot.lane.b32.xlu0 %v164, 40
  %v1945 = vpop.permute.xlu0 %1944
  %1946 = vrot.lane.b32.xlu0 %v169, 40
  %v1947 = vpop.permute.xlu0 %1946
  %1948 = vrot.lane.b32.xlu0 %v174, 40
  %v1949 = vpop.permute.xlu0 %1948
  %1950 = vrot.lane.b32.xlu0 %v179, 40
  %v1951 = vpop.permute.xlu0 %1950
  %1952 = vrot.lane.b32.xlu0 %v184, 40
  %v1953 = vpop.permute.xlu0 %1952
  %v1965 = vsel %vm383, %v1924, 0
  %v1968 = vsel %vm383, %v1925, 0
  %v1971 = vsel %vm383, %v1926, 0
  %v1974 = vsel %vm383, %v1927, 0
  %v1977 = vsel %vm383, %v1928, 0
  %v1980 = vsel %vm383, %v1929, 0
  %v1983 = vsel %vm383, %v1930, 0
  %v1986 = vsel %vm383, %v1931, 0
  %v1989 = vsel %vm383, %v1932, 0
  %v1992 = vsel %vm383, %v1933, 0
  %1994 = vmatprep.subr.mxu0 0.0
  %1995 = vmatpush1.msra.mxu0 %v1935
  %1996 = vmatprep.subr.mxu0 0.0
  %1997 = vmatpush1.msra.mxu0 %v1937
  %1998 = vmatprep.subr.mxu0 0.0
  %1999 = vmatpush1.msra.mxu0 %v1939
  %2000 = vmatprep.subr.mxu0 0.0
  %2001 = vmatpush1.msra.mxu0 %v1941
  %2002 = vmatprep.subr.mxu0 0.0
  %2003 = vmatpush1.msra.mxu0 %v1943
  %2004 = vmatprep.subr.mxu0 0.0
  %2005 = vmatpush1.msra.mxu0 %v1945
  %2006 = vmatprep.subr.mxu0 0.0
  %2007 = vmatpush1.msra.mxu0 %v1947
  %2008 = vmatprep.subr.mxu0 0.0
  %2009 = vmatpush1.msra.mxu0 %v1949
  %2010 = vmatprep.subr.mxu0 0.0
  %2011 = vmatpush1.msra.mxu0 %v1951
  %2012 = vmatprep.subr.mxu0 0.0
  %2013 = vmatpush1.msra.mxu0 %v1953
  %2014 = vmatprep.subr.mxu0 0.0
  %2015 = vmatpush1.msra.mxu0 0.0
  %2016 = vmatprep.subr.mxu0 0.0
  %2017 = vmatpush1.msra.mxu0 0.0
  %2018 = vmatprep.subr.mxu0 0.0
  %2019 = vmatpush1.msra.mxu0 0.0
  %2020 = vmatprep.subr.mxu0 0.0
  %2021 = vmatpush1.msra.mxu0 0.0
  %2022 = vmatprep.subr.mxu0 0.0
  %2023 = vmatpush1.msra.mxu0 0.0
  %2024 = vmatprep.subr.mxu0 0.0
  %2025 = vmatpush1.msra.mxu0 0.0
  %2026 = vmatprep.subr.mxu0 0.0
  %2027 = vmatpush1.msra.mxu0 0.0
  %2028 = vmatprep.subr.mxu0 0.0
  %2029 = vmatpush1.msra.mxu0 0.0
  %2030 = vmatprep.subr.mxu0 0.0
  %2031 = vmatpush1.msra.mxu0 0.0
  %2032 = vmatprep.subr.mxu0 0.0
  %2033 = vmatpush1.msra.mxu0 0.0
  %2034 = vmatprep.subr.mxu0 0.0
  %2035 = vmatpush1.msra.mxu0 0.0
  %2036 = vmatprep.subr.mxu0 0.0
  %2037 = vmatpush1.msra.mxu0 0.0
  %2038 = vmatprep.subr.mxu0 0.0
  %2039 = vmatpush1.msra.mxu0 0.0
  %2040 = vmatprep.subr.mxu0 0.0
  %2041 = vmatpush1.msra.mxu0 0.0
  %2042 = vmatprep.subr.mxu0 0.0
  %2043 = vmatpush1.msra.mxu0 0.0
  %2044 = vmatprep.subr.mxu0 0.0
  %2045 = vmatpush1.msra.mxu0 0.0
  %2046 = vmatprep.subr.mxu0 0.0
  %2047 = vmatpush1.msra.mxu0 0.0
  %2048 = vmatprep.subr.mxu0 0.0
  %2049 = vmatpush1.msra.mxu0 0.0
  %2050 = vmatprep.subr.mxu0 0.0
  %2051 = vmatpush1.msra.mxu0 0.0
  %2052 = vmatprep.subr.mxu0 0.0
  %2053 = vmatpush1.msra.mxu0 0.0
  %2054 = vmatprep.subr.mxu0 0.0
  %2055 = vmatpush1.msra.mxu0 0.0
  %2056 = vmatprep.subr.mxu0 0.0
  %2057 = vmatpush1.msra.mxu0 0.0
  %2058 = vmatprep.mubr.f32.mxu0 0.0
  %2059 = vmatmul.mubr.f32.gmra.mrb[0].mxu0 %v1965
  %v2060 = vpop.f32.mrb[0].mxu0
  %v2061 = vadd.f32 0.0, %v2060
  %v2062 = vpop.f32.mrb[0].mxu0
  %2063 = vmatprep.mubr.f32.mxu0 0.0
  %2064 = vmatmul.mubr.f32.gmra.mrb[0].mxu0 %v1968
  %v2065 = vpop.f32.mrb[0].mxu0
  %v2066 = vadd.f32 0.0, %v2065
  %v2067 = vpop.f32.mrb[0].mxu0
  %2068 = vmatprep.mubr.f32.mxu0 0.0
  %2069 = vmatmul.mubr.f32.gmra.mrb[0].mxu0 %v1971
  %v2070 = vpop.f32.mrb[0].mxu0
  %v2071 = vadd.f32 0.0, %v2070
  %v2072 = vpop.f32.mrb[0].mxu0
  %2073 = vmatprep.mubr.f32.mxu0 0.0
  %2074 = vmatmul.mubr.f32.gmra.mrb[0].mxu0 %v1974
  %v2075 = vpop.f32.mrb[0].mxu0
  %v2076 = vadd.f32 0.0, %v2075
  %v2077 = vpop.f32.mrb[0].mxu0
  %2078 = vmatprep.mubr.f32.mxu0 0.0
  %2079 = vmatmul.mubr.f32.gmra.mrb[0].mxu0 %v1977
  %v2080 = vpop.f32.mrb[0].mxu0
  %v2081 = vadd.f32 0.0, %v2080
  %v2082 = vpop.f32.mrb[0].mxu0
  %2083 = vmatprep.mubr.f32.mxu0 0.0
  %2084 = vmatmul.mubr.f32.gmra.mrb[0].mxu0 %v1980
  %v2085 = vpop.f32.mrb[0].mxu0
  %v2086 = vadd.f32 0.0, %v2085
  %v2087 = vpop.f32.mrb[0].mxu0
  %2088 = vmatprep.mubr.f32.mxu0 0.0
  %2089 = vmatmul.mubr.f32.gmra.mrb[0].mxu0 %v1983
  %v2090 = vpop.f32.mrb[0].mxu0
  %v2091 = vadd.f32 0.0, %v2090
  %v2092 = vpop.f32.mrb[0].mxu0
  %2093 = vmatprep.mubr.f32.mxu0 0.0
  %2094 = vmatmul.mubr.f32.gmra.mrb[0].mxu0 %v1986
  %v2095 = vpop.f32.mrb[0].mxu0
  %v2096 = vadd.f32 0.0, %v2095
  %v2097 = vpop.f32.mrb[0].mxu0
  %2098 = vmatprep.mubr.f32.mxu0 0.0
  %2099 = vmatmul.mubr.f32.gmra.mrb[0].mxu0 %v1989
  %v2100 = vpop.f32.mrb[0].mxu0
  %v2101 = vadd.f32 0.0, %v2100
  %v2102 = vpop.f32.mrb[0].mxu0
  %2103 = vmatprep.mubr.f32.mxu0 0.0
  %2104 = vmatmul.mubr.f32.gmra.mrb[0].mxu0 %v1992
  %v2105 = vpop.f32.mrb[0].mxu0
  %v2106 = vadd.f32 0.0, %v2105
  %v2107 = vpop.f32.mrb[0].mxu0
  %2108 = vdwg.mxu0
  %2119 = vrot.lane.b32.xlu0 %v1101, 8
  %v2120 = vpop.permute.xlu0 %2119
  %2121 = vrot.lane.b32.xlu0 %v1106, 8
  %v2122 = vpop.permute.xlu0 %2121
  %2123 = vrot.lane.b32.xlu0 %v1111, 8
  %v2124 = vpop.permute.xlu0 %2123
  %2125 = vrot.lane.b32.xlu0 %v1116, 8
  %v2126 = vpop.permute.xlu0 %2125
  %2127 = vrot.lane.b32.xlu0 %v1121, 8
  %v2128 = vpop.permute.xlu0 %2127
  %2129 = vrot.lane.b32.xlu0 %v1126, 8
  %v2130 = vpop.permute.xlu0 %2129
  %2131 = vrot.lane.b32.xlu0 %v1131, 8
  %v2132 = vpop.permute.xlu0 %2131
  %2133 = vrot.lane.b32.xlu0 %v1136, 8
  %v2134 = vpop.permute.xlu0 %2133
  %2135 = vrot.lane.b32.xlu0 %v1141, 8
  %v2136 = vpop.permute.xlu0 %2135
  %2137 = vrot.lane.b32.xlu0 %v1146, 8
  %v2138 = vpop.permute.xlu0 %2137
  %2159 = vrot.lane.b32.xlu0 %v1581, 16
  %v2160 = vpop.permute.xlu0 %2159
  %2161 = vrot.lane.b32.xlu0 %v1586, 16
  %v2162 = vpop.permute.xlu0 %2161
  %2163 = vrot.lane.b32.xlu0 %v1591, 16
  %v2164 = vpop.permute.xlu0 %2163
  %2165 = vrot.lane.b32.xlu0 %v1596, 16
  %v2166 = vpop.permute.xlu0 %2165
  %2167 = vrot.lane.b32.xlu0 %v1601, 16
  %v2168 = vpop.permute.xlu0 %2167
  %2169 = vrot.lane.b32.xlu0 %v1606, 16
  %v2170 = vpop.permute.xlu0 %2169
  %2171 = vrot.lane.b32.xlu0 %v1611, 16
  %v2172 = vpop.permute.xlu0 %2171
  %2173 = vrot.lane.b32.xlu0 %v1616, 16
  %v2174 = vpop.permute.xlu0 %2173
  %2175 = vrot.lane.b32.xlu0 %v1621, 16
  %v2176 = vpop.permute.xlu0 %2175
  %2177 = vrot.lane.b32.xlu0 %v1626, 16
  %v2178 = vpop.permute.xlu0 %2177
  %2199 = vrot.lane.b32.xlu0 %v2061, 24
  %v2200 = vpop.permute.xlu0 %2199
  %2201 = vrot.lane.b32.xlu0 %v2066, 24
  %v2202 = vpop.permute.xlu0 %2201
  %2203 = vrot.lane.b32.xlu0 %v2071, 24
  %v2204 = vpop.permute.xlu0 %2203
  %2205 = vrot.lane.b32.xlu0 %v2076, 24
  %v2206 = vpop.permute.xlu0 %2205
  %2207 = vrot.lane.b32.xlu0 %v2081, 24
  %v2208 = vpop.permute.xlu0 %2207
  %2209 = vrot.lane.b32.xlu0 %v2086, 24
  %v2210 = vpop.permute.xlu0 %2209
  %2211 = vrot.lane.b32.xlu0 %v2091, 24
  %v2212 = vpop.permute.xlu0 %2211
  %2213 = vrot.lane.b32.xlu0 %v2096, 24
  %v2214 = vpop.permute.xlu0 %2213
  %2215 = vrot.lane.b32.xlu0 %v2101, 24
  %v2216 = vpop.permute.xlu0 %2215
  %2217 = vrot.lane.b32.xlu0 %v2106, 24
  %v2218 = vpop.permute.xlu0 %2217
  %v2229 = vsel %vm227, %v621, %v2120
  %v2230 = vsel %vm227, %v626, %v2122
  %v2231 = vsel %vm227, %v631, %v2124
  %v2232 = vsel %vm227, %v636, %v2126
  %v2233 = vsel %vm227, %v641, %v2128
  %v2234 = vsel %vm227, %v646, %v2130
  %v2235 = vsel %vm227, %v651, %v2132
  %v2236 = vsel %vm227, %v656, %v2134
  %v2237 = vsel %vm227, %v661, %v2136
  %v2238 = vsel %vm227, %v666, %v2138
  %vm2239 = vcmask 130048
  %v2240 = vsel %vm2239, %v2229, %v2160
  %v2241 = vsel %vm2239, %v2230, %v2162
  %v2242 = vsel %vm2239, %v2231, %v2164
  %v2243 = vsel %vm2239, %v2232, %v2166
  %v2244 = vsel %vm2239, %v2233, %v2168
  %v2245 = vsel %vm2239, %v2234, %v2170
  %v2246 = vsel %vm2239, %v2235, %v2172
  %v2247 = vsel %vm2239, %v2236, %v2174
  %v2248 = vsel %vm2239, %v2237, %v2176
  %v2249 = vsel %vm2239, %v2238, %v2178
  %vm2250 = vcmask 195584
  %v2251 = vsel %vm2250, %v2240, %v2200
  %v2252 = vsel %vm2250, %v2241, %v2202
  %v2253 = vsel %vm2250, %v2242, %v2204
  %v2254 = vsel %vm2250, %v2243, %v2206
  %v2255 = vsel %vm2250, %v2244, %v2208
  %v2256 = vsel %vm2250, %v2245, %v2210
  %v2257 = vsel %vm2250, %v2246, %v2212
  %v2258 = vsel %vm2250, %v2247, %v2214
  %v2259 = vsel %vm2250, %v2248, %v2216
  %v2260 = vsel %vm2250, %v2249, %v2218
  %2265 = vrot.lane.b32.xlu0 %v30, 32
  %v2266 = vpop.permute.xlu0 %2265
  %2267 = vrot.lane.b32.xlu0 %v31, 32
  %v2268 = vpop.permute.xlu0 %2267
  %2269 = vrot.lane.b32.xlu0 %v32, 32
  %v2270 = vpop.permute.xlu0 %2269
  %2271 = vrot.lane.b32.xlu0 %v33, 32
  %v2272 = vpop.permute.xlu0 %2271
  %2277 = vrot.lane.b32.xlu0 %v39, 32
  %v2278 = vpop.permute.xlu0 %2277
  %v2281 = vsel %vm41, %v2251, 0
  %v2284 = vsel %vm41, %v2252, 0
  %v2287 = vsel %vm41, %v2253, 0
  %v2290 = vsel %vm41, %v2254, 0
  %v2293 = vsel %vm41, %v2255, 0
  %v2296 = vsel %vm41, %v2256, 0
  %v2299 = vsel %vm41, %v2257, 0
  %v2302 = vsel %vm41, %v2258, 0
  %v2305 = vsel %vm41, %v2259, 0
  %v2308 = vsel %vm41, %v2260, 0
  %2310 = vmatprep.subr.mxu0 0.0
  %2311 = vmatpush1.msra.mxu0 %v2266
  %2312 = vmatprep.subr.mxu0 0.0
  %2313 = vmatpush1.msra.mxu0 %v2268
  %2314 = vmatprep.subr.mxu0 0.0
  %2315 = vmatpush1.msra.mxu0 %v2270
  %2316 = vmatprep.subr.mxu0 0.0
  %2317 = vmatpush1.msra.mxu0 %v2272
  %2318 = vmatprep.subr.mxu0 0.0
  %2319 = vmatpush1.msra.mxu0 0.0
  %2320 = vmatprep.subr.mxu0 0.0
  %2321 = vmatpush1.msra.mxu0 0.0
  %2322 = vmatprep.subr.mxu0 0.0
  %2323 = vmatpush1.msra.mxu0 0.0
  %2324 = vmatprep.subr.mxu0 0.0
  %2325 = vmatpush1.msra.mxu0 0.0
  %2326 = vmatprep.subr.mxu0 0.0
  %2327 = vmatpush1.msra.mxu0 0.0
  %2328 = vmatprep.subr.mxu0 0.0
  %2329 = vmatpush1.msra.mxu0 0.0
  %2330 = vmatprep.subr.mxu0 0.0
  %2331 = vmatpush1.msra.mxu0 0.0
  %2332 = vmatprep.subr.mxu0 0.0
  %2333 = vmatpush1.msra.mxu0 0.0
  %2334 = vmatprep.subr.mxu0 0.0
  %2335 = vmatpush1.msra.mxu0 0.0
  %2336 = vmatprep.subr.mxu0 0.0
  %2337 = vmatpush1.msra.mxu0 0.0
  %2338 = vmatprep.subr.mxu0 0.0
  %2339 = vmatpush1.msra.mxu0 0.0
  %2340 = vmatprep.subr.mxu0 0.0
  %2341 = vmatpush1.msra.mxu0 0.0
  %2342 = vmatprep.subr.mxu0 0.0
  %2343 = vmatpush1.msra.mxu0 0.0
  %2344 = vmatprep.subr.mxu0 0.0
  %2345 = vmatpush1.msra.mxu0 0.0
  %2346 = vmatprep.subr.mxu0 0.0
  %2347 = vmatpush1.msra.mxu0 0.0
  %2348 = vmatprep.subr.mxu0 0.0
  %2349 = vmatpush1.msra.mxu0 0.0
  %2350 = vmatprep.subr.mxu0 0.0
  %2351 = vmatpush1.msra.mxu0 0.0
  %2352 = vmatprep.subr.mxu0 0.0
  %2353 = vmatpush1.msra.mxu0 0.0
  %2354 = vmatprep.subr.mxu0 0.0
  %2355 = vmatpush1.msra.mxu0 0.0
  %2356 = vmatprep.subr.mxu0 0.0
  %2357 = vmatpush1.msra.mxu0 0.0
  %2358 = vmatprep.subr.mxu0 0.0
  %2359 = vmatpush1.msra.mxu0 0.0
  %2360 = vmatprep.subr.mxu0 0.0
  %2361 = vmatpush1.msra.mxu0 0.0
  %2362 = vmatprep.subr.mxu0 0.0
  %2363 = vmatpush1.msra.mxu0 0.0
  %2364 = vmatprep.subr.mxu0 0.0
  %2365 = vmatpush1.msra.mxu0 0.0
  %2366 = vmatprep.subr.mxu0 0.0
  %2367 = vmatpush1.msra.mxu0 0.0
  %2368 = vmatprep.subr.mxu0 0.0
  %2369 = vmatpush1.msra.mxu0 0.0
  %2370 = vmatprep.subr.mxu0 0.0
  %2371 = vmatpush1.msra.mxu0 0.0
  %2372 = vmatprep.subr.mxu0 0.0
  %2373 = vmatpush1.msra.mxu0 0.0
  %2374 = vmatprep.mubr.f32.mxu0 0.0
  %2375 = vmatmul.mubr.f32.gmra.mrb[0].mxu0 %v2281
  %v2376 = vpop.f32.mrb[0].mxu0
  %v2377 = vadd.f32 %v2278, %v2376
  %v2378 = vpop.f32.mrb[0].mxu0
  %2379 = vmatprep.mubr.f32.mxu0 0.0
  %2380 = vmatmul.mubr.f32.gmra.mrb[0].mxu0 %v2284
  %v2381 = vpop.f32.mrb[0].mxu0
  %v2382 = vadd.f32 %v2278, %v2381
  %v2383 = vpop.f32.mrb[0].mxu0
  %2384 = vmatprep.mubr.f32.mxu0 0.0
  %2385 = vmatmul.mubr.f32.gmra.mrb[0].mxu0 %v2287
  %v2386 = vpop.f32.mrb[0].mxu0
  %v2387 = vadd.f32 %v2278, %v2386
  %v2388 = vpop.f32.mrb[0].mxu0
  %2389 = vmatprep.mubr.f32.mxu0 0.0
  %2390 = vmatmul.mubr.f32.gmra.mrb[0].mxu0 %v2290
  %v2391 = vpop.f32.mrb[0].mxu0
  %v2392 = vadd.f32 %v2278, %v2391
  %v2393 = vpop.f32.mrb[0].mxu0
  %2394 = vmatprep.mubr.f32.mxu0 0.0
  %2395 = vmatmul.mubr.f32.gmra.mrb[0].mxu0 %v2293
  %v2396 = vpop.f32.mrb[0].mxu0
  %v2397 = vadd.f32 %v2278, %v2396
  %v2398 = vpop.f32.mrb[0].mxu0
  %2399 = vmatprep.mubr.f32.mxu0 0.0
  %2400 = vmatmul.mubr.f32.gmra.mrb[0].mxu0 %v2296
  %v2401 = vpop.f32.mrb[0].mxu0
  %v2402 = vadd.f32 %v2278, %v2401
  %v2403 = vpop.f32.mrb[0].mxu0
  %2404 = vmatprep.mubr.f32.mxu0 0.0
  %2405 = vmatmul.mubr.f32.gmra.mrb[0].mxu0 %v2299
  %v2406 = vpop.f32.mrb[0].mxu0
  %v2407 = vadd.f32 %v2278, %v2406
  %v2408 = vpop.f32.mrb[0].mxu0
  %2409 = vmatprep.mubr.f32.mxu0 0.0
  %2410 = vmatmul.mubr.f32.gmra.mrb[0].mxu0 %v2302
  %v2411 = vpop.f32.mrb[0].mxu0
  %v2412 = vadd.f32 %v2278, %v2411
  %v2413 = vpop.f32.mrb[0].mxu0
  %2414 = vmatprep.mubr.f32.mxu0 0.0
  %2415 = vmatmul.mubr.f32.gmra.mrb[0].mxu0 %v2305
  %v2416 = vpop.f32.mrb[0].mxu0
  %v2417 = vadd.f32 %v2278, %v2416
  %v2418 = vpop.f32.mrb[0].mxu0
  %2419 = vmatprep.mubr.f32.mxu0 0.0
  %2420 = vmatmul.mubr.f32.gmra.mrb[0].mxu0 %v2308
  %v2421 = vpop.f32.mrb[0].mxu0
  %v2422 = vadd.f32 %v2278, %v2421
  %v2423 = vpop.f32.mrb[0].mxu0
  %2424 = vdwg.mxu0
  %v2425 = vld [vmem:[%s4] sm:$0xff]
  %v2427 = vsel %vm383, %v2425, 0
  %2429 = vmatprep.subr.mxu0 0.0
  %2430 = vmatpush1.msra.mxu0 %v2377
  %2431 = vmatprep.subr.mxu0 0.0
  %2432 = vmatpush1.msra.mxu0 %v2382
  %2433 = vmatprep.subr.mxu0 0.0
  %2434 = vmatpush1.msra.mxu0 %v2387
  %2435 = vmatprep.subr.mxu0 0.0
  %2436 = vmatpush1.msra.mxu0 %v2392
  %2437 = vmatprep.subr.mxu0 0.0
  %2438 = vmatpush1.msra.mxu0 %v2397
  %2439 = vmatprep.subr.mxu0 0.0
  %2440 = vmatpush1.msra.mxu0 %v2402
  %2441 = vmatprep.subr.mxu0 0.0
  %2442 = vmatpush1.msra.mxu0 %v2407
  %2443 = vmatprep.subr.mxu0 0.0
  %2444 = vmatpush1.msra.mxu0 %v2412
  %2445 = vmatprep.subr.mxu0 0.0
  %2446 = vmatpush1.msra.mxu0 %v2417
  %2447 = vmatprep.subr.mxu0 0.0
  %2448 = vmatpush1.msra.mxu0 %v2422
  %2449 = vmatprep.subr.mxu0 0.0
  %2450 = vmatpush1.msra.mxu0 0.0
  %2451 = vmatprep.subr.mxu0 0.0
  %2452 = vmatpush1.msra.mxu0 0.0
  %2453 = vmatprep.subr.mxu0 0.0
  %2454 = vmatpush1.msra.mxu0 0.0
  %2455 = vmatprep.subr.mxu0 0.0
  %2456 = vmatpush1.msra.mxu0 0.0
  %2457 = vmatprep.subr.mxu0 0.0
  %2458 = vmatpush1.msra.mxu0 0.0
  %2459 = vmatprep.subr.mxu0 0.0
  %2460 = vmatpush1.msra.mxu0 0.0
  %2461 = vmatprep.subr.mxu0 0.0
  %2462 = vmatpush1.msra.mxu0 0.0
  %2463 = vmatprep.subr.mxu0 0.0
  %2464 = vmatpush1.msra.mxu0 0.0
  %2465 = vmatprep.subr.mxu0 0.0
  %2466 = vmatpush1.msra.mxu0 0.0
  %2467 = vmatprep.subr.mxu0 0.0
  %2468 = vmatpush1.msra.mxu0 0.0
  %2469 = vmatprep.subr.mxu0 0.0
  %2470 = vmatpush1.msra.mxu0 0.0
  %2471 = vmatprep.subr.mxu0 0.0
  %2472 = vmatpush1.msra.mxu0 0.0
  %2473 = vmatprep.subr.mxu0 0.0
  %2474 = vmatpush1.msra.mxu0 0.0
  %2475 = vmatprep.subr.mxu0 0.0
  %2476 = vmatpush1.msra.mxu0 0.0
  %2477 = vmatprep.subr.mxu0 0.0
  %2478 = vmatpush1.msra.mxu0 0.0
  %2479 = vmatprep.subr.mxu0 0.0
  %2480 = vmatpush1.msra.mxu0 0.0
  %2481 = vmatprep.subr.mxu0 0.0
  %2482 = vmatpush1.msra.mxu0 0.0
  %2483 = vmatprep.subr.mxu0 0.0
  %2484 = vmatpush1.msra.mxu0 0.0
  %2485 = vmatprep.subr.mxu0 0.0
  %2486 = vmatpush1.msra.mxu0 0.0
  %2487 = vmatprep.subr.mxu0 0.0
  %2488 = vmatpush1.msra.mxu0 0.0
  %2489 = vmatprep.subr.mxu0 0.0
  %2490 = vmatpush1.msra.mxu0 0.0
  %2491 = vmatprep.subr.mxu0 0.0
  %2492 = vmatpush1.msra.mxu0 0.0
  %2493 = vmatprep.mubr.f32.mxu0 0.0
  %2494 = vmatmul.mubr.f32.gmra.mrb[0].mxu0 %v2427
  %v2495 = vpop.f32.mrb[0].mxu0
  %v2496 = vadd.f32 1e-06, %v2495
  %v2497 = vpop.f32.mrb[0].mxu0
  %2498 = vdwg.mxu0
  %v2499 = vmul.f32 %v2496, %v2496
  %v2500 = vsel %vm41, %v2499, 0.0
  %2501 = vadd.xlane.f32.xlu0 %v2500
  %v2502 = vpop.xlane.xlu0 %2501
  %v2503 = vrsqrt.pop %v2502
  %v2504 = vmul.f32 %v2502, %v2503
  %vm2505 = vcmp.eq.f32.partialorder %v2502, inf
  %v2506 = vsel %vm2505, %v2502, %v2504
  %vm2507 = vcmp.eq.f32.partialorder %v2502, 0.0
  %v2508 = vand.u32 %v2502, 2147483648
  %v2509 = vsel %vm2507, %v2508, %v2506
  %v2510 = vsub.f32 0.0, %v2509
  %vm2511 = vcmask 7168
  %2512 = vst.msk [vmem:[%s5] sm:$0xff] %vm2511, %v2510
  // Predicated region
  $region22: #{tpu_custom_call.1} parent=0 // pred_check
    _
  $region23: #{tpu_custom_call.1} parent=0 // pred_check_branch
    %2514 = sbr.rel (0) target = $region25
  $region24: #{tpu_custom_call.1} parent=0 // pred_region
    _
  $region25: #{tpu_custom_call.1} parent=0 // pred_fallthru
    _
  // Predicated region
  $region26: #{tpu_custom_call.1} parent=0 // pred_check
    _
  $region27: #{tpu_custom_call.1} parent=0 // pred_check_branch
    %2516 = sbr.rel (0) target = $region29
  $region28: #{tpu_custom_call.1} parent=0 // pred_region
    _
  $region29: #{tpu_custom_call.1} parent=0 // pred_fallthru
    _

</llo_original>
